<compile_context>
chip_gen: v5e
topology: v5e:2x2
jax: 0.10.0
libtpu: 0.0.40
codegen_flags: <defaults>
</compile_context>

<pallas_src>
import jax
import jax.numpy as jnp
from jax.experimental import pallas as pl
from jax.experimental.pallas import tpu as pltpu

LN_EPS = 1e-5  # torch.nn.LayerNorm default


def _round_up(n, m):
    return ((n + m - 1) // m) * m


def _ln_relu(h, gamma, beta):
    """LayerNorm over last dim (biased variance, like PyTorch) then ReLU. f32."""
    mu = jnp.mean(h, axis=-1, keepdims=True)
    var = jnp.mean((h - mu) * (h - mu), axis=-1, keepdims=True)
    y = (h - mu) * jax.lax.rsqrt(var + LN_EPS)
    return jnp.maximum(y * gamma + beta, 0.0)


def dqn_kernel(
    x_ref,
    w1_ref, b1_ref, g1_ref, be1_ref,
    w2_ref, b2_ref, g2_ref, be2_ref,
    w3_ref, b3_ref, g3_ref, be3_ref,
    w4_ref, b4_ref,
    out_ref,
):
    # Matmul inputs in bf16 (native MXU input on all generations), accumulate
    # in f32; bias add + LayerNorm + ReLU all in f32.
    h = jnp.dot(x_ref[...].astype(jnp.bfloat16), w1_ref[...],
                preferred_element_type=jnp.float32) + b1_ref[...]
    h = _ln_relu(h, g1_ref[...], be1_ref[...])

    h = jnp.dot(h.astype(jnp.bfloat16), w2_ref[...],
                preferred_element_type=jnp.float32) + b2_ref[...]
    h = _ln_relu(h, g2_ref[...], be2_ref[...])

    h = jnp.dot(h.astype(jnp.bfloat16), w3_ref[...],
                preferred_element_type=jnp.float32) + b3_ref[...]
    h = _ln_relu(h, g3_ref[...], be3_ref[...])

    h = jnp.dot(h.astype(jnp.bfloat16), w4_ref[...],
                preferred_element_type=jnp.float32) + b4_ref[...]
    out_ref[...] = h.astype(out_ref.dtype)


def prepare_params(params):
    """One-time prep: bf16 weights, fc4 padded to a lane-dense (x128) width.

    Biases and LayerNorm gamma/beta stay f32 (tiny, and LN math is f32).
    """
    n_actions = params["w4"].shape[1]
    n_act_pad = _round_up(n_actions, 128)
    kp = dict(params)
    for i in (1, 2, 3):
        kp[f"w{i}"] = params[f"w{i}"].astype(jnp.bfloat16)
    kp["w4"] = jnp.pad(
        params["w4"], ((0, 0), (0, n_act_pad - n_actions))).astype(jnp.bfloat16)
    kp["b4"] = jnp.pad(params["b4"], ((0, 0), (0, n_act_pad - n_actions)))
    return kp


def dqn_forward(x, kparams, n_actions, *, max_tile_b=256):
    """x: (B, n_obs) f32.  kparams: output of prepare_params.  -> (B, n_actions)."""
    B, n_obs = x.shape
    n_act_pad = kparams["w4"].shape[1]

    # Batch tiling: round B up to a sublane multiple; tile at up to 256 rows so
    # large batches fill the 256-wide MXU (v6e/v7x) and split across v7x cores.
    b_tile = min(max_tile_b, _round_up(B, 8))
    B_pad = _round_up(B, b_tile)
    x_p = x if B_pad == B else jnp.pad(x, ((0, B_pad - B), (0, 0)))

    param_ops = (
        kparams["w1"], kparams["b1"], kparams["g1"], kparams["be1"],
        kparams["w2"], kparams["b2"], kparams["g2"], kparams["be2"],
        kparams["w3"], kparams["b3"], kparams["g3"], kparams["be3"],
        kparams["w4"], kparams["b4"],
    )

    x_spec = pl.BlockSpec((b_tile, n_obs), lambda i: (i, 0))
    # Constant index_map -> weights DMA'd once, stay resident across grid steps.
    param_specs = [pl.BlockSpec(a.shape, lambda i: (0, 0)) for a in param_ops]
    out_spec = pl.BlockSpec((b_tile, n_act_pad), lambda i: (i, 0))

    out = pl.pallas_call(
        dqn_kernel,
        out_shape=jax.ShapeDtypeStruct((B_pad, n_act_pad), jnp.float32),
        grid=(B_pad // b_tile,),
        in_specs=[x_spec] + param_specs,
        out_specs=out_spec,
        compiler_params=pltpu.CompilerParams(
            dimension_semantics=("parallel",)),
    )(x_p, *param_ops)

    return out[:B, :n_actions]


def init_params(key, n_observations, n_actions):
    """Deterministic synthetic init (PyTorch-like uniform fan-in scaling), f32."""
    dims = [(n_observations, 1024), (1024, 512), (512, 256), (256, n_actions)]
    params = {}
    keys = jax.random.split(key, 2 * len(dims))
    for i, (fan_in, fan_out) in enumerate(dims):
        bound = 1.0 / jnp.sqrt(fan_in)
        params[f"w{i + 1}"] = jax.random.uniform(
            keys[2 * i], (fan_in, fan_out), jnp.float32, -bound, bound)
        params[f"b{i + 1}"] = jax.random.uniform(
            keys[2 * i + 1], (1, fan_out), jnp.float32, -bound, bound)
    # LayerNorm affine params: ones / zeros (PyTorch default init).
    for i, d in enumerate([1024, 512, 256], start=1):
        params[f"g{i}"] = jnp.ones((1, d), jnp.float32)
        params[f"be{i}"] = jnp.zeros((1, d), jnp.float32)
    return params


def dqn_ref(x, p):
    """Pure-JAX reference mirroring the kernel's numerics (bf16 matmul inputs,
    f32 accumulation, f32 LayerNorm) for correctness checking."""
    def mm(h, w):
        return jnp.dot(h.astype(jnp.bfloat16), w.astype(jnp.bfloat16),
                       preferred_element_type=jnp.float32)
    h = x
    for i in range(1, 4):
        h = mm(h, p[f"w{i}"]) + p[f"b{i}"]
        mu = jnp.mean(h, axis=-1, keepdims=True)
        var = jnp.mean((h - mu) ** 2, axis=-1, keepdims=True)
        h = (h - mu) * jax.lax.rsqrt(var + LN_EPS) * p[f"g{i}"] + p[f"be{i}"]
        h = jnp.maximum(h, 0.0)
    return mm(h, p["w4"]) + p["b4"]


if __name__ == "__main__":
    n_observations = 32
    n_actions = 8

    key = jax.random.PRNGKey(0)
    kx, kx2, kp = jax.random.split(key, 3)
    params = init_params(kp, n_observations, n_actions)
    kparams = prepare_params(params)  # one-time bf16 cast + lane-dense padding

    # Small batch (single tile, single grid step).
    x = jax.random.normal(kx, (8, n_observations), jnp.float32)
    out = jax.block_until_ready(dqn_forward(x, kparams, n_actions))
    ref = dqn_ref(x, params)
    assert out.shape == (8, n_actions)
    assert jnp.allclose(out, ref, atol=1e-2, rtol=1e-2)

    # Larger, non-multiple batch: exercises batch padding + parallel batch grid.
    x2 = jax.random.normal(kx2, (300, n_observations), jnp.float32)
    out2 = jax.block_until_ready(dqn_forward(x2, kparams, n_actions))
    ref2 = dqn_ref(x2, params)
    assert out2.shape == (300, n_actions)
    assert jnp.allclose(out2, ref2, atol=1e-2, rtol=1e-2)

    print("KERNEL_OK")
</pallas_src>

<mosaic_0001>
module attributes {stable_mosaic.version = 11 : i64} {
  func.func @dqn_kernel(%arg0: i32, %arg1: memref<8x32xf32, #tpu.memory_space<vmem>>, %arg2: memref<32x1024xbf16, #tpu.memory_space<vmem>>, %arg3: memref<1x1024xf32, #tpu.memory_space<vmem>>, %arg4: memref<1x1024xf32, #tpu.memory_space<vmem>>, %arg5: memref<1x1024xf32, #tpu.memory_space<vmem>>, %arg6: memref<1024x512xbf16, #tpu.memory_space<vmem>>, %arg7: memref<1x512xf32, #tpu.memory_space<vmem>>, %arg8: memref<1x512xf32, #tpu.memory_space<vmem>>, %arg9: memref<1x512xf32, #tpu.memory_space<vmem>>, %arg10: memref<512x256xbf16, #tpu.memory_space<vmem>>, %arg11: memref<1x256xf32, #tpu.memory_space<vmem>>, %arg12: memref<1x256xf32, #tpu.memory_space<vmem>>, %arg13: memref<1x256xf32, #tpu.memory_space<vmem>>, %arg14: memref<256x128xbf16, #tpu.memory_space<vmem>>, %arg15: memref<1x128xf32, #tpu.memory_space<vmem>>, %arg16: memref<8x128xf32, #tpu.memory_space<vmem>>) attributes {dimension_semantics = [#tpu.dimension_semantics<parallel>], iteration_bounds = array<i64: 1>, scalar_prefetch = 0 : i64, scratch_operands = 0 : i64, tpu.core_type = #tpu.core_type<tc>, window_params = [{transform_indices = @transform_0, window_bounds = array<i64: 8, 32>}, {pipeline_mode = #tpu.pipeline_mode<synchronous>, transform_indices = @transform_1, window_bounds = array<i64: 32, 1024>}, {pipeline_mode = #tpu.pipeline_mode<synchronous>, transform_indices = @transform_2, window_bounds = array<i64: 1, 1024>}, {pipeline_mode = #tpu.pipeline_mode<synchronous>, transform_indices = @transform_3, window_bounds = array<i64: 1, 1024>}, {pipeline_mode = #tpu.pipeline_mode<synchronous>, transform_indices = @transform_4, window_bounds = array<i64: 1, 1024>}, {pipeline_mode = #tpu.pipeline_mode<synchronous>, transform_indices = @transform_5, window_bounds = array<i64: 1024, 512>}, {pipeline_mode = #tpu.pipeline_mode<synchronous>, transform_indices = @transform_6, window_bounds = array<i64: 1, 512>}, {pipeline_mode = #tpu.pipeline_mode<synchronous>, transform_indices = @transform_7, window_bounds = array<i64: 1, 512>}, {pipeline_mode = #tpu.pipeline_mode<synchronous>, transform_indices = @transform_8, window_bounds = array<i64: 1, 512>}, {pipeline_mode = #tpu.pipeline_mode<synchronous>, transform_indices = @transform_9, window_bounds = array<i64: 512, 256>}, {pipeline_mode = #tpu.pipeline_mode<synchronous>, transform_indices = @transform_10, window_bounds = array<i64: 1, 256>}, {pipeline_mode = #tpu.pipeline_mode<synchronous>, transform_indices = @transform_11, window_bounds = array<i64: 1, 256>}, {pipeline_mode = #tpu.pipeline_mode<synchronous>, transform_indices = @transform_12, window_bounds = array<i64: 1, 256>}, {pipeline_mode = #tpu.pipeline_mode<synchronous>, transform_indices = @transform_13, window_bounds = array<i64: 256, 128>}, {pipeline_mode = #tpu.pipeline_mode<synchronous>, transform_indices = @transform_14, window_bounds = array<i64: 1, 128>}, {transform_indices = @transform_15, window_bounds = array<i64: 8, 128>}]} {
    %c0 = arith.constant 0 : index
    %c0_0 = arith.constant 0 : index
    %0 = vector.load %arg1[%c0, %c0_0] : memref<8x32xf32, #tpu.memory_space<vmem>>, vector<8x32xf32>
    %1 = arith.truncf %0 : vector<8x32xf32> to vector<8x32xbf16>
    %c0_1 = arith.constant 0 : index
    %c0_2 = arith.constant 0 : index
    %2 = vector.load %arg2[%c0_1, %c0_2] : memref<32x1024xbf16, #tpu.memory_space<vmem>>, vector<32x1024xbf16>
    %cst = arith.constant dense<0.000000e+00> : vector<8x1024xf32>
    %3 = tpu.matmul %1, %2, %cst {dimension_numbers = #tpu.dot_dimension_numbers<[1], [0], [0], [1], [0, 0, 1, 1], [], []>} : vector<8x32xbf16>, vector<32x1024xbf16>, vector<8x1024xf32> -> vector<8x1024xf32>
    %c0_3 = arith.constant 0 : index
    %c0_4 = arith.constant 0 : index
    %4 = vector.load %arg3[%c0_3, %c0_4] : memref<1x1024xf32, #tpu.memory_space<vmem>>, vector<1x1024xf32>
    %5 = vector.broadcast %4 : vector<1x1024xf32> to vector<8x1024xf32>
    %6 = arith.addf %3, %5 : vector<8x1024xf32>
    %c0_5 = arith.constant 0 : index
    %c0_6 = arith.constant 0 : index
    %7 = vector.load %arg4[%c0_5, %c0_6] : memref<1x1024xf32, #tpu.memory_space<vmem>>, vector<1x1024xf32>
    %c0_7 = arith.constant 0 : index
    %c0_8 = arith.constant 0 : index
    %8 = vector.load %arg5[%c0_7, %c0_8] : memref<1x1024xf32, #tpu.memory_space<vmem>>, vector<1x1024xf32>
    %cst_9 = arith.constant dense<0.000000e+00> : vector<8xf32>
    %9 = vector.multi_reduction <add>, %6, %cst_9 [1] : vector<8x1024xf32> to vector<8xf32>
    %10 = vector.shape_cast %9 : vector<8xf32> to vector<8x1xf32>
    %cst_10 = arith.constant 1.024000e+03 : f32
    %11 = vector.broadcast %cst_10 : f32 to vector<8x1xf32>
    %12 = arith.divf %10, %11 : vector<8x1xf32>
    %13 = vector.broadcast %12 : vector<8x1xf32> to vector<8x1024xf32>
    %14 = arith.subf %6, %13 : vector<8x1024xf32>
    %15 = vector.broadcast %12 : vector<8x1xf32> to vector<8x1024xf32>
    %16 = arith.subf %6, %15 : vector<8x1024xf32>
    %17 = arith.mulf %14, %16 : vector<8x1024xf32>
    %cst_11 = arith.constant dense<0.000000e+00> : vector<8xf32>
    %18 = vector.multi_reduction <add>, %17, %cst_11 [1] : vector<8x1024xf32> to vector<8xf32>
    %19 = vector.shape_cast %18 : vector<8xf32> to vector<8x1xf32>
    %cst_12 = arith.constant 1.024000e+03 : f32
    %20 = vector.broadcast %cst_12 : f32 to vector<8x1xf32>
    %21 = arith.divf %19, %20 : vector<8x1xf32>
    %22 = vector.broadcast %12 : vector<8x1xf32> to vector<8x1024xf32>
    %23 = arith.subf %6, %22 : vector<8x1024xf32>
    %cst_13 = arith.constant 9.99999974E-6 : f32
    %24 = vector.broadcast %cst_13 : f32 to vector<8x1xf32>
    %25 = arith.addf %21, %24 : vector<8x1xf32>
    %26 = math.rsqrt %25 : vector<8x1xf32>
    %27 = vector.broadcast %26 : vector<8x1xf32> to vector<8x1024xf32>
    %28 = arith.mulf %23, %27 : vector<8x1024xf32>
    %29 = vector.broadcast %7 : vector<1x1024xf32> to vector<8x1024xf32>
    %30 = arith.mulf %28, %29 : vector<8x1024xf32>
    %31 = vector.broadcast %8 : vector<1x1024xf32> to vector<8x1024xf32>
    %32 = arith.addf %30, %31 : vector<8x1024xf32>
    %cst_14 = arith.constant 0.000000e+00 : f32
    %33 = vector.broadcast %cst_14 : f32 to vector<8x1024xf32>
    %34 = arith.maximumf %32, %33 : vector<8x1024xf32>
    %35 = arith.truncf %34 : vector<8x1024xf32> to vector<8x1024xbf16>
    %c0_15 = arith.constant 0 : index
    %c0_16 = arith.constant 0 : index
    %36 = vector.load %arg6[%c0_15, %c0_16] : memref<1024x512xbf16, #tpu.memory_space<vmem>>, vector<1024x512xbf16>
    %cst_17 = arith.constant dense<0.000000e+00> : vector<8x512xf32>
    %37 = tpu.matmul %35, %36, %cst_17 {dimension_numbers = #tpu.dot_dimension_numbers<[1], [0], [0], [1], [0, 0, 1, 1], [], []>} : vector<8x1024xbf16>, vector<1024x512xbf16>, vector<8x512xf32> -> vector<8x512xf32>
    %c0_18 = arith.constant 0 : index
    %c0_19 = arith.constant 0 : index
    %38 = vector.load %arg7[%c0_18, %c0_19] : memref<1x512xf32, #tpu.memory_space<vmem>>, vector<1x512xf32>
    %39 = vector.broadcast %38 : vector<1x512xf32> to vector<8x512xf32>
    %40 = arith.addf %37, %39 : vector<8x512xf32>
    %c0_20 = arith.constant 0 : index
    %c0_21 = arith.constant 0 : index
    %41 = vector.load %arg8[%c0_20, %c0_21] : memref<1x512xf32, #tpu.memory_space<vmem>>, vector<1x512xf32>
    %c0_22 = arith.constant 0 : index
    %c0_23 = arith.constant 0 : index
    %42 = vector.load %arg9[%c0_22, %c0_23] : memref<1x512xf32, #tpu.memory_space<vmem>>, vector<1x512xf32>
    %cst_24 = arith.constant dense<0.000000e+00> : vector<8xf32>
    %43 = vector.multi_reduction <add>, %40, %cst_24 [1] : vector<8x512xf32> to vector<8xf32>
    %44 = vector.shape_cast %43 : vector<8xf32> to vector<8x1xf32>
    %cst_25 = arith.constant 5.120000e+02 : f32
    %45 = vector.broadcast %cst_25 : f32 to vector<8x1xf32>
    %46 = arith.divf %44, %45 : vector<8x1xf32>
    %47 = vector.broadcast %46 : vector<8x1xf32> to vector<8x512xf32>
    %48 = arith.subf %40, %47 : vector<8x512xf32>
    %49 = vector.broadcast %46 : vector<8x1xf32> to vector<8x512xf32>
    %50 = arith.subf %40, %49 : vector<8x512xf32>
    %51 = arith.mulf %48, %50 : vector<8x512xf32>
    %cst_26 = arith.constant dense<0.000000e+00> : vector<8xf32>
    %52 = vector.multi_reduction <add>, %51, %cst_26 [1] : vector<8x512xf32> to vector<8xf32>
    %53 = vector.shape_cast %52 : vector<8xf32> to vector<8x1xf32>
    %cst_27 = arith.constant 5.120000e+02 : f32
    %54 = vector.broadcast %cst_27 : f32 to vector<8x1xf32>
    %55 = arith.divf %53, %54 : vector<8x1xf32>
    %56 = vector.broadcast %46 : vector<8x1xf32> to vector<8x512xf32>
    %57 = arith.subf %40, %56 : vector<8x512xf32>
    %cst_28 = arith.constant 9.99999974E-6 : f32
    %58 = vector.broadcast %cst_28 : f32 to vector<8x1xf32>
    %59 = arith.addf %55, %58 : vector<8x1xf32>
    %60 = math.rsqrt %59 : vector<8x1xf32>
    %61 = vector.broadcast %60 : vector<8x1xf32> to vector<8x512xf32>
    %62 = arith.mulf %57, %61 : vector<8x512xf32>
    %63 = vector.broadcast %41 : vector<1x512xf32> to vector<8x512xf32>
    %64 = arith.mulf %62, %63 : vector<8x512xf32>
    %65 = vector.broadcast %42 : vector<1x512xf32> to vector<8x512xf32>
    %66 = arith.addf %64, %65 : vector<8x512xf32>
    %cst_29 = arith.constant 0.000000e+00 : f32
    %67 = vector.broadcast %cst_29 : f32 to vector<8x512xf32>
    %68 = arith.maximumf %66, %67 : vector<8x512xf32>
    %69 = arith.truncf %68 : vector<8x512xf32> to vector<8x512xbf16>
    %c0_30 = arith.constant 0 : index
    %c0_31 = arith.constant 0 : index
    %70 = vector.load %arg10[%c0_30, %c0_31] : memref<512x256xbf16, #tpu.memory_space<vmem>>, vector<512x256xbf16>
    %cst_32 = arith.constant dense<0.000000e+00> : vector<8x256xf32>
    %71 = tpu.matmul %69, %70, %cst_32 {dimension_numbers = #tpu.dot_dimension_numbers<[1], [0], [0], [1], [0, 0, 1, 1], [], []>} : vector<8x512xbf16>, vector<512x256xbf16>, vector<8x256xf32> -> vector<8x256xf32>
    %c0_33 = arith.constant 0 : index
    %c0_34 = arith.constant 0 : index
    %72 = vector.load %arg11[%c0_33, %c0_34] : memref<1x256xf32, #tpu.memory_space<vmem>>, vector<1x256xf32>
    %73 = vector.broadcast %72 : vector<1x256xf32> to vector<8x256xf32>
    %74 = arith.addf %71, %73 : vector<8x256xf32>
    %c0_35 = arith.constant 0 : index
    %c0_36 = arith.constant 0 : index
    %75 = vector.load %arg12[%c0_35, %c0_36] : memref<1x256xf32, #tpu.memory_space<vmem>>, vector<1x256xf32>
    %c0_37 = arith.constant 0 : index
    %c0_38 = arith.constant 0 : index
    %76 = vector.load %arg13[%c0_37, %c0_38] : memref<1x256xf32, #tpu.memory_space<vmem>>, vector<1x256xf32>
    %cst_39 = arith.constant dense<0.000000e+00> : vector<8xf32>
    %77 = vector.multi_reduction <add>, %74, %cst_39 [1] : vector<8x256xf32> to vector<8xf32>
    %78 = vector.shape_cast %77 : vector<8xf32> to vector<8x1xf32>
    %cst_40 = arith.constant 2.560000e+02 : f32
    %79 = vector.broadcast %cst_40 : f32 to vector<8x1xf32>
    %80 = arith.divf %78, %79 : vector<8x1xf32>
    %81 = vector.broadcast %80 : vector<8x1xf32> to vector<8x256xf32>
    %82 = arith.subf %74, %81 : vector<8x256xf32>
    %83 = vector.broadcast %80 : vector<8x1xf32> to vector<8x256xf32>
    %84 = arith.subf %74, %83 : vector<8x256xf32>
    %85 = arith.mulf %82, %84 : vector<8x256xf32>
    %cst_41 = arith.constant dense<0.000000e+00> : vector<8xf32>
    %86 = vector.multi_reduction <add>, %85, %cst_41 [1] : vector<8x256xf32> to vector<8xf32>
    %87 = vector.shape_cast %86 : vector<8xf32> to vector<8x1xf32>
    %cst_42 = arith.constant 2.560000e+02 : f32
    %88 = vector.broadcast %cst_42 : f32 to vector<8x1xf32>
    %89 = arith.divf %87, %88 : vector<8x1xf32>
    %90 = vector.broadcast %80 : vector<8x1xf32> to vector<8x256xf32>
    %91 = arith.subf %74, %90 : vector<8x256xf32>
    %cst_43 = arith.constant 9.99999974E-6 : f32
    %92 = vector.broadcast %cst_43 : f32 to vector<8x1xf32>
    %93 = arith.addf %89, %92 : vector<8x1xf32>
    %94 = math.rsqrt %93 : vector<8x1xf32>
    %95 = vector.broadcast %94 : vector<8x1xf32> to vector<8x256xf32>
    %96 = arith.mulf %91, %95 : vector<8x256xf32>
    %97 = vector.broadcast %75 : vector<1x256xf32> to vector<8x256xf32>
    %98 = arith.mulf %96, %97 : vector<8x256xf32>
    %99 = vector.broadcast %76 : vector<1x256xf32> to vector<8x256xf32>
    %100 = arith.addf %98, %99 : vector<8x256xf32>
    %cst_44 = arith.constant 0.000000e+00 : f32
    %101 = vector.broadcast %cst_44 : f32 to vector<8x256xf32>
    %102 = arith.maximumf %100, %101 : vector<8x256xf32>
    %103 = arith.truncf %102 : vector<8x256xf32> to vector<8x256xbf16>
    %c0_45 = arith.constant 0 : index
    %c0_46 = arith.constant 0 : index
    %104 = vector.load %arg14[%c0_45, %c0_46] : memref<256x128xbf16, #tpu.memory_space<vmem>>, vector<256x128xbf16>
    %cst_47 = arith.constant dense<0.000000e+00> : vector<8x128xf32>
    %105 = tpu.matmul %103, %104, %cst_47 {dimension_numbers = #tpu.dot_dimension_numbers<[1], [0], [0], [1], [0, 0, 1, 1], [], []>} : vector<8x256xbf16>, vector<256x128xbf16>, vector<8x128xf32> -> vector<8x128xf32>
    %c0_48 = arith.constant 0 : index
    %c0_49 = arith.constant 0 : index
    %106 = vector.load %arg15[%c0_48, %c0_49] : memref<1x128xf32, #tpu.memory_space<vmem>>, vector<1x128xf32>
    %107 = vector.broadcast %106 : vector<1x128xf32> to vector<8x128xf32>
    %108 = arith.addf %105, %107 : vector<8x128xf32>
    %c0_50 = arith.constant 0 : index
    %c0_51 = arith.constant 0 : index
    %109 = vector.load %arg16[%c0_50, %c0_51] : memref<8x128xf32, #tpu.memory_space<vmem>>, vector<8x128xf32>
    tpu.vector_store %arg16[%c0_50, %c0_51], %108 {strides = array<i32>} : memref<8x128xf32, #tpu.memory_space<vmem>>, vector<8x128xf32>,
    return
  }
  func.func @transform_0(%arg0: i32) -> (i32, i32) {
    %c0_i32 = arith.constant 0 : i32
    %c0_i32_0 = arith.constant 0 : i32
    return %arg0, %c0_i32 : i32, i32
  }
  func.func @transform_1(%arg0: i32) -> (i32, i32) {
    %c0_i32 = arith.constant 0 : i32
    %c0_i32_0 = arith.constant 0 : i32
    %c0_i32_1 = arith.constant 0 : i32
    return %c0_i32, %c0_i32_0 : i32, i32
  }
  func.func @transform_2(%arg0: i32) -> (i32, i32) {
    %c0_i32 = arith.constant 0 : i32
    %c0_i32_0 = arith.constant 0 : i32
    %c0_i32_1 = arith.constant 0 : i32
    return %c0_i32, %c0_i32_0 : i32, i32
  }
  func.func @transform_3(%arg0: i32) -> (i32, i32) {
    %c0_i32 = arith.constant 0 : i32
    %c0_i32_0 = arith.constant 0 : i32
    %c0_i32_1 = arith.constant 0 : i32
    return %c0_i32, %c0_i32_0 : i32, i32
  }
  func.func @transform_4(%arg0: i32) -> (i32, i32) {
    %c0_i32 = arith.constant 0 : i32
    %c0_i32_0 = arith.constant 0 : i32
    %c0_i32_1 = arith.constant 0 : i32
    return %c0_i32, %c0_i32_0 : i32, i32
  }
  func.func @transform_5(%arg0: i32) -> (i32, i32) {
    %c0_i32 = arith.constant 0 : i32
    %c0_i32_0 = arith.constant 0 : i32
    %c0_i32_1 = arith.constant 0 : i32
    return %c0_i32, %c0_i32_0 : i32, i32
  }
  func.func @transform_6(%arg0: i32) -> (i32, i32) {
    %c0_i32 = arith.constant 0 : i32
    %c0_i32_0 = arith.constant 0 : i32
    %c0_i32_1 = arith.constant 0 : i32
    return %c0_i32, %c0_i32_0 : i32, i32
  }
  func.func @transform_7(%arg0: i32) -> (i32, i32) {
    %c0_i32 = arith.constant 0 : i32
    %c0_i32_0 = arith.constant 0 : i32
    %c0_i32_1 = arith.constant 0 : i32
    return %c0_i32, %c0_i32_0 : i32, i32
  }
  func.func @transform_8(%arg0: i32) -> (i32, i32) {
    %c0_i32 = arith.constant 0 : i32
    %c0_i32_0 = arith.constant 0 : i32
    %c0_i32_1 = arith.constant 0 : i32
    return %c0_i32, %c0_i32_0 : i32, i32
  }
  func.func @transform_9(%arg0: i32) -> (i32, i32) {
    %c0_i32 = arith.constant 0 : i32
    %c0_i32_0 = arith.constant 0 : i32
    %c0_i32_1 = arith.constant 0 : i32
    return %c0_i32, %c0_i32_0 : i32, i32
  }
  func.func @transform_10(%arg0: i32) -> (i32, i32) {
    %c0_i32 = arith.constant 0 : i32
    %c0_i32_0 = arith.constant 0 : i32
    %c0_i32_1 = arith.constant 0 : i32
    return %c0_i32, %c0_i32_0 : i32, i32
  }
  func.func @transform_11(%arg0: i32) -> (i32, i32) {
    %c0_i32 = arith.constant 0 : i32
    %c0_i32_0 = arith.constant 0 : i32
    %c0_i32_1 = arith.constant 0 : i32
    return %c0_i32, %c0_i32_0 : i32, i32
  }
  func.func @transform_12(%arg0: i32) -> (i32, i32) {
    %c0_i32 = arith.constant 0 : i32
    %c0_i32_0 = arith.constant 0 : i32
    %c0_i32_1 = arith.constant 0 : i32
    return %c0_i32, %c0_i32_0 : i32, i32
  }
  func.func @transform_13(%arg0: i32) -> (i32, i32) {
    %c0_i32 = arith.constant 0 : i32
    %c0_i32_0 = arith.constant 0 : i32
    %c0_i32_1 = arith.constant 0 : i32
    return %c0_i32, %c0_i32_0 : i32, i32
  }
  func.func @transform_14(%arg0: i32) -> (i32, i32) {
    %c0_i32 = arith.constant 0 : i32
    %c0_i32_0 = arith.constant 0 : i32
    %c0_i32_1 = arith.constant 0 : i32
    return %c0_i32, %c0_i32_0 : i32, i32
  }
  func.func @transform_15(%arg0: i32) -> (i32, i32) {
    %c0_i32 = arith.constant 0 : i32
    %c0_i32_0 = arith.constant 0 : i32
    return %arg0, %c0_i32 : i32, i32
  }
}

</mosaic_0001>

<llo_original>
// kernel: tpu_custom_call.1
$region0: #{tpu_custom_call.1}
  #allocation0 [shape = 'u32[]', space=smem, size = 0x4, offset = 0x4, fixed_abs, tag = 'smem constant byte address 0x4 - core index']
  #allocation1 [shape = 'u32[72,128]{1,0:T(1,128)}', space=vmem, size = 0x9000, scoped, tag = 'internal scratch']
  %s0 = inlined_call_operand.hbm [shape: f32[8,32], index: 0, kind: input, shape index: {}]
  %s1 = inlined_call_operand.hbm [shape: bf16[32,1024], index: 1, kind: input, shape index: {}]
  %s2 = inlined_call_operand.hbm [shape: f32[1,1024], index: 2, kind: input, shape index: {}]
  %s3 = inlined_call_operand.hbm [shape: f32[1,1024], index: 3, kind: input, shape index: {}]
  %s4 = inlined_call_operand.hbm [shape: f32[1,1024], index: 4, kind: input, shape index: {}]
  %s5 = inlined_call_operand.hbm [shape: bf16[1024,512], index: 5, kind: input, shape index: {}]
  %s6 = inlined_call_operand.vmem [shape: f32[1,512], index: 6, kind: input, shape index: {}]
  %s7 = inlined_call_operand.hbm [shape: f32[1,512], index: 7, kind: input, shape index: {}]
  %s8 = inlined_call_operand.hbm [shape: f32[1,512], index: 8, kind: input, shape index: {}]
  %s9 = inlined_call_operand.hbm [shape: bf16[512,256], index: 9, kind: input, shape index: {}]
  %s10 = inlined_call_operand.vmem [shape: f32[1,256], index: 10, kind: input, shape index: {}]
  %s11 = inlined_call_operand.vmem [shape: f32[1,256], index: 11, kind: input, shape index: {}]
  %s12 = inlined_call_operand.vmem [shape: f32[1,256], index: 12, kind: input, shape index: {}]
  %s13 = inlined_call_operand.hbm [shape: bf16[256,128], index: 13, kind: input, shape index: {}]
  %s14 = inlined_call_operand.vmem [shape: f32[1,128], index: 14, kind: input, shape index: {}]
  %s15 = inlined_call_operand.hbm [shape: f32[8,128], index: 15, kind: output, shape index: {}]
  %s16 = sld [smem:[#allocation0]]
  $region110: #{tpu_custom_call.1} parent=0
    _
  %s18 = ssub.s32 1, %s16
  %s19 = scalar_select 0, %s18, %s16
  $region1: #{tpu_custom_call.1} parent=0
    #allocation2 [shape = 'u8[4096]{0}', space=vmem, size = 0x1000, scoped, tag = 'input window, operand 0, single buffered']
    #allocation3 [shape = 's32[1]{0}', space=sflag, size = 0x4, scoped, tag = 'scoped memory for tpu_custom_call.1']
    #allocation4 [shape = 's32[1]{0}', space=sflag, size = 0x4, scoped, tag = 'scoped memory for tpu_custom_call.1']
    #allocation5 [shape = 'u8[65536]{0}', space=vmem, size = 0x10000, scoped, tag = 'input window, operand 1, single buffered']
    #allocation6 [shape = 's32[1]{0}', space=sflag, size = 0x4, scoped, tag = 'scoped memory for tpu_custom_call.1']
    #allocation7 [shape = 'u8[4096]{0}', space=vmem, size = 0x1000, scoped, tag = 'input window, operand 2, single buffered']
    #allocation8 [shape = 'u8[4096]{0}', space=vmem, size = 0x1000, scoped, tag = 'input window, operand 3, single buffered']
    #allocation9 [shape = 's32[1]{0}', space=sflag, size = 0x4, scoped, tag = 'scoped memory for tpu_custom_call.1']
    #allocation10 [shape = 'u8[4096]{0}', space=vmem, size = 0x1000, scoped, tag = 'input window, operand 4, single buffered']
    #allocation11 [shape = 'u8[1048576]{0}', space=vmem, size = 0x100000, scoped, tag = 'input window, operand 5, single buffered']
    #allocation12 [shape = 's32[1]{0}', space=sflag, size = 0x4, scoped, tag = 'scoped memory for tpu_custom_call.1']
    #allocation13 [shape = 'u8[2048]{0}', space=vmem, size = 0x800, scoped, tag = 'input window, operand 7, single buffered']
    #allocation14 [shape = 'u8[2048]{0}', space=vmem, size = 0x800, scoped, tag = 'input window, operand 8, single buffered']
    #allocation15 [shape = 's32[1]{0}', space=sflag, size = 0x4, scoped, tag = 'scoped memory for tpu_custom_call.1']
    #allocation16 [shape = 'u8[262144]{0}', space=vmem, size = 0x40000, scoped, tag = 'input window, operand 9, single buffered']
    #allocation17 [shape = 'u8[65536]{0}', space=vmem, size = 0x10000, scoped, tag = 'input window, operand 13, single buffered']
    #allocation18 [shape = 's32[1]{0}', space=sflag, size = 0x4, scoped, tag = 'scoped memory for tpu_custom_call.1']
    #allocation19 [shape = 'u8[4096]{0}', space=vmem, size = 0x1000, scoped, tag = 'output window, operand 0, single buffered']
    %20 = vsyncpa [#allocation3], 0
    %21 = vsyncpa [#allocation6], 0
    %22 = vsyncpa [#allocation9], 0
    %23 = vsyncpa [#allocation12], 0
    %24 = vsyncpa [#allocation15], 0
    %25 = vsyncpa [#allocation18], 0
    %26 = vsyncpa [#allocation4], 0
    // Predicated region
    $region2: #{tpu_custom_call.1} parent=1 // pred_check
      _
    $region3: #{tpu_custom_call.1} parent=1 // pred_check_branch
      %28 = sbr.rel (0) target = $region5
    $region4: #{tpu_custom_call.1} parent=1 // pred_region
      %30 = vsyncadd [#allocation3], 0
      %s32 = sshll.u32 %s0, 4
      %s33 = int_to_ptr.hbm [resolvable:$true] %s32
      %s34 = sshll.u32 [#allocation2], 4
      %s35 = int_to_ptr.vmem [resolvable:$true] %s34
      %37 = dma.hbm_to_vmem [thread:$0]  %s33, 128, %s35, [#allocation3]
    $region5: #{tpu_custom_call.1} parent=1 // pred_fallthru
      _
    // Predicated region
    $region6: #{tpu_custom_call.1} parent=1 // pred_check
      _
    $region7: #{tpu_custom_call.1} parent=1 // pred_check_branch
      %39 = sbr.rel (0) target = $region9
    $region8: #{tpu_custom_call.1} parent=1 // pred_region
      %41 = vsyncadd [#allocation6], 0
      %s42 = sshll.u32 %s1, 4
      %s43 = int_to_ptr.hbm [resolvable:$true] %s42
      %s44 = sshll.u32 [#allocation5], 4
      %s45 = int_to_ptr.vmem [resolvable:$true] %s44
      %50 = dma.hbm_to_vmem [thread:$0]  %s43, 2048, %s45, [#allocation6], 512, 512, 32
    $region9: #{tpu_custom_call.1} parent=1 // pred_fallthru
      _
    // Predicated region
    $region10: #{tpu_custom_call.1} parent=1 // pred_check
      _
    $region11: #{tpu_custom_call.1} parent=1 // pred_check_branch
      %52 = sbr.rel (0) target = $region13
    $region12: #{tpu_custom_call.1} parent=1 // pred_region
      %54 = vsyncadd [#allocation6], 0
      %s56 = sshll.u32 %s2, 4
      %s57 = int_to_ptr.hbm [resolvable:$true] %s56
      %s58 = sshll.u32 [#allocation7], 4
      %s59 = int_to_ptr.vmem [resolvable:$true] %s58
      %61 = dma.hbm_to_vmem [thread:$0]  %s57, 128, %s59, [#allocation6]
    $region13: #{tpu_custom_call.1} parent=1 // pred_fallthru
      _
    // Predicated region
    $region14: #{tpu_custom_call.1} parent=1 // pred_check
      _
    $region15: #{tpu_custom_call.1} parent=1 // pred_check_branch
      %63 = sbr.rel (0) target = $region17
    $region16: #{tpu_custom_call.1} parent=1 // pred_region
      %65 = vsyncadd [#allocation9], 0
      %s67 = sshll.u32 %s3, 4
      %s68 = int_to_ptr.hbm [resolvable:$true] %s67
      %s69 = sshll.u32 [#allocation8], 4
      %s70 = int_to_ptr.vmem [resolvable:$true] %s69
      %72 = dma.hbm_to_vmem [thread:$0]  %s68, 128, %s70, [#allocation9]
    $region17: #{tpu_custom_call.1} parent=1 // pred_fallthru
      _
    // Predicated region
    $region18: #{tpu_custom_call.1} parent=1 // pred_check
      _
    $region19: #{tpu_custom_call.1} parent=1 // pred_check_branch
      %74 = sbr.rel (0) target = $region21
    $region20: #{tpu_custom_call.1} parent=1 // pred_region
      %76 = vsyncadd [#allocation9], 0
      %s78 = sshll.u32 %s4, 4
      %s79 = int_to_ptr.hbm [resolvable:$true] %s78
      %s80 = sshll.u32 [#allocation10], 4
      %s81 = int_to_ptr.vmem [resolvable:$true] %s80
      %83 = dma.hbm_to_vmem [thread:$0]  %s79, 128, %s81, [#allocation9]
    $region21: #{tpu_custom_call.1} parent=1 // pred_fallthru
      _
    // Predicated region
    $region22: #{tpu_custom_call.1} parent=1 // pred_check
      _
    $region23: #{tpu_custom_call.1} parent=1 // pred_check_branch
      %85 = sbr.rel (0) target = $region25
    $region24: #{tpu_custom_call.1} parent=1 // pred_region
      %87 = vsyncadd [#allocation12], 0
      %s88 = sshll.u32 %s5, 4
      %s89 = int_to_ptr.hbm [resolvable:$true] %s88
      %s90 = sshll.u32 [#allocation11], 4
      %s91 = int_to_ptr.vmem [resolvable:$true] %s90
      %96 = dma.hbm_to_vmem [thread:$0]  %s89, 32768, %s91, [#allocation12], 256, 256, 16
    $region25: #{tpu_custom_call.1} parent=1 // pred_fallthru
      _
    // Predicated region
    $region26: #{tpu_custom_call.1} parent=1 // pred_check
      _
    $region27: #{tpu_custom_call.1} parent=1 // pred_check_branch
      %98 = sbr.rel (0) target = $region29
    $region28: #{tpu_custom_call.1} parent=1 // pred_region
      _
    $region29: #{tpu_custom_call.1} parent=1 // pred_fallthru
      _
    // Predicated region
    $region30: #{tpu_custom_call.1} parent=1 // pred_check
      _
    $region31: #{tpu_custom_call.1} parent=1 // pred_check_branch
      %100 = sbr.rel (0) target = $region33
    $region32: #{tpu_custom_call.1} parent=1 // pred_region
      %102 = vsyncadd [#allocation12], 0
      %s104 = sshll.u32 %s7, 4
      %s105 = int_to_ptr.hbm [resolvable:$true] %s104
      %s106 = sshll.u32 [#allocation13], 4
      %s107 = int_to_ptr.vmem [resolvable:$true] %s106
      %109 = dma.hbm_to_vmem [thread:$0]  %s105, 64, %s107, [#allocation12]
    $region33: #{tpu_custom_call.1} parent=1 // pred_fallthru
      _
    // Predicated region
    $region34: #{tpu_custom_call.1} parent=1 // pred_check
      _
    $region35: #{tpu_custom_call.1} parent=1 // pred_check_branch
      %111 = sbr.rel (0) target = $region37
    $region36: #{tpu_custom_call.1} parent=1 // pred_region
      %113 = vsyncadd [#allocation15], 0
      %s115 = sshll.u32 %s8, 4
      %s116 = int_to_ptr.hbm [resolvable:$true] %s115
      %s117 = sshll.u32 [#allocation14], 4
      %s118 = int_to_ptr.vmem [resolvable:$true] %s117
      %120 = dma.hbm_to_vmem [thread:$0]  %s116, 64, %s118, [#allocation15]
    $region37: #{tpu_custom_call.1} parent=1 // pred_fallthru
      _
    // Predicated region
    $region38: #{tpu_custom_call.1} parent=1 // pred_check
      _
    $region39: #{tpu_custom_call.1} parent=1 // pred_check_branch
      %122 = sbr.rel (0) target = $region41
    $region40: #{tpu_custom_call.1} parent=1 // pred_region
      %124 = vsyncadd [#allocation15], 0
      %s125 = sshll.u32 %s9, 4
      %s126 = int_to_ptr.hbm [resolvable:$true] %s125
      %s127 = sshll.u32 [#allocation16], 4
      %s128 = int_to_ptr.vmem [resolvable:$true] %s127
      %133 = dma.hbm_to_vmem [thread:$0]  %s126, 8192, %s128, [#allocation15], 128, 128, 8
    $region41: #{tpu_custom_call.1} parent=1 // pred_fallthru
      _
    // Predicated region
    $region42: #{tpu_custom_call.1} parent=1 // pred_check
      _
    $region43: #{tpu_custom_call.1} parent=1 // pred_check_branch
      %135 = sbr.rel (0) target = $region45
    $region44: #{tpu_custom_call.1} parent=1 // pred_region
      _
    $region45: #{tpu_custom_call.1} parent=1 // pred_fallthru
      _
    // Predicated region
    $region46: #{tpu_custom_call.1} parent=1 // pred_check
      _
    $region47: #{tpu_custom_call.1} parent=1 // pred_check_branch
      %137 = sbr.rel (0) target = $region49
    $region48: #{tpu_custom_call.1} parent=1 // pred_region
      _
    $region49: #{tpu_custom_call.1} parent=1 // pred_fallthru
      _
    // Predicated region
    $region50: #{tpu_custom_call.1} parent=1 // pred_check
      _
    $region51: #{tpu_custom_call.1} parent=1 // pred_check_branch
      %139 = sbr.rel (0) target = $region53
    $region52: #{tpu_custom_call.1} parent=1 // pred_region
      _
    $region53: #{tpu_custom_call.1} parent=1 // pred_fallthru
      _
    // Predicated region
    $region54: #{tpu_custom_call.1} parent=1 // pred_check
      _
    $region55: #{tpu_custom_call.1} parent=1 // pred_check_branch
      %141 = sbr.rel (0) target = $region57
    $region56: #{tpu_custom_call.1} parent=1 // pred_region
      %143 = vsyncadd [#allocation18], 0
      %s144 = sshll.u32 %s13, 4
      %s145 = int_to_ptr.hbm [resolvable:$true] %s144
      %s146 = sshll.u32 [#allocation17], 4
      %s147 = int_to_ptr.vmem [resolvable:$true] %s146
      %152 = dma.hbm_to_vmem [thread:$0]  %s145, 2048, %s147, [#allocation18], 64, 64, 4
    $region57: #{tpu_custom_call.1} parent=1 // pred_fallthru
      _
    // Predicated region
    $region58: #{tpu_custom_call.1} parent=1 // pred_check
      _
    $region59: #{tpu_custom_call.1} parent=1 // pred_check_branch
      %154 = sbr.rel (0) target = $region61
    $region60: #{tpu_custom_call.1} parent=1 // pred_region
      _
    $region61: #{tpu_custom_call.1} parent=1 // pred_fallthru
      _
    // Predicated region
    $region62: #{tpu_custom_call.1} parent=1 // pred_check
      _
    $region63: #{tpu_custom_call.1} parent=1 // pred_check_branch
      %156 = sbr.rel (0) target = $region65
    $region64: #{tpu_custom_call.1} parent=1 // pred_region
      %158 = dma.done [#allocation3], 128
    $region65: #{tpu_custom_call.1} parent=1 // pred_fallthru
      _
    // Predicated region
    $region66: #{tpu_custom_call.1} parent=1 // pred_check
      _
    $region67: #{tpu_custom_call.1} parent=1 // pred_check_branch
      %160 = sbr.rel (0) target = $region69
    $region68: #{tpu_custom_call.1} parent=1 // pred_region
      %162 = dma.done [#allocation6], 2048
    $region69: #{tpu_custom_call.1} parent=1 // pred_fallthru
      _
    // Predicated region
    $region70: #{tpu_custom_call.1} parent=1 // pred_check
      _
    $region71: #{tpu_custom_call.1} parent=1 // pred_check_branch
      %164 = sbr.rel (0) target = $region73
    $region72: #{tpu_custom_call.1} parent=1 // pred_region
      %166 = dma.done [#allocation6], 128
    $region73: #{tpu_custom_call.1} parent=1 // pred_fallthru
      _
    // Predicated region
    $region74: #{tpu_custom_call.1} parent=1 // pred_check
      _
    $region75: #{tpu_custom_call.1} parent=1 // pred_check_branch
      %168 = sbr.rel (0) target = $region77
    $region76: #{tpu_custom_call.1} parent=1 // pred_region
      %170 = dma.done [#allocation9], 128
    $region77: #{tpu_custom_call.1} parent=1 // pred_fallthru
      _
    // Predicated region
    $region78: #{tpu_custom_call.1} parent=1 // pred_check
      _
    $region79: #{tpu_custom_call.1} parent=1 // pred_check_branch
      %172 = sbr.rel (0) target = $region81
    $region80: #{tpu_custom_call.1} parent=1 // pred_region
      %174 = dma.done [#allocation9], 128
    $region81: #{tpu_custom_call.1} parent=1 // pred_fallthru
      _
    // Predicated region
    $region82: #{tpu_custom_call.1} parent=1 // pred_check
      _
    $region83: #{tpu_custom_call.1} parent=1 // pred_check_branch
      %176 = sbr.rel (0) target = $region85
    $region84: #{tpu_custom_call.1} parent=1 // pred_region
      %178 = dma.done [#allocation12], 32768
    $region85: #{tpu_custom_call.1} parent=1 // pred_fallthru
      _
    // Predicated region
    $region86: #{tpu_custom_call.1} parent=1 // pred_check
      _
    $region87: #{tpu_custom_call.1} parent=1 // pred_check_branch
      %180 = sbr.rel (0) target = $region89
    $region88: #{tpu_custom_call.1} parent=1 // pred_region
      %182 = dma.done [#allocation12], 64
    $region89: #{tpu_custom_call.1} parent=1 // pred_fallthru
      _
    // Predicated region
    $region90: #{tpu_custom_call.1} parent=1 // pred_check
      _
    $region91: #{tpu_custom_call.1} parent=1 // pred_check_branch
      %184 = sbr.rel (0) target = $region93
    $region92: #{tpu_custom_call.1} parent=1 // pred_region
      %186 = dma.done [#allocation15], 64
    $region93: #{tpu_custom_call.1} parent=1 // pred_fallthru
      _
    // Predicated region
    $region94: #{tpu_custom_call.1} parent=1 // pred_check
      _
    $region95: #{tpu_custom_call.1} parent=1 // pred_check_branch
      %188 = sbr.rel (0) target = $region97
    $region96: #{tpu_custom_call.1} parent=1 // pred_region
      %190 = dma.done [#allocation15], 8192
    $region97: #{tpu_custom_call.1} parent=1 // pred_fallthru
      _
    // Predicated region
    $region98: #{tpu_custom_call.1} parent=1 // pred_check
      _
    $region99: #{tpu_custom_call.1} parent=1 // pred_check_branch
      %192 = sbr.rel (0) target = $region101
    $region100: #{tpu_custom_call.1} parent=1 // pred_region
      %194 = dma.done [#allocation18], 2048
    $region101: #{tpu_custom_call.1} parent=1 // pred_fallthru
      _
    %v196 = vld [vmem:[#allocation2] sm:$0xff]
    %v197 = vpack.c.bf16 %v196, %v196
    %v198 = vld [vmem:[#allocation5] sm:$0xff]
    %v199 = vld [vmem:[#allocation5 + $0x8] sm:$0xff]
    %v200 = vld [vmem:[#allocation5 + $0x10] sm:$0xff]
    %v201 = vld [vmem:[#allocation5 + $0x18] sm:$0xff]
    %v202 = vld [vmem:[#allocation5 + $0x20] sm:$0xff]
    %v203 = vld [vmem:[#allocation5 + $0x28] sm:$0xff]
    %v204 = vld [vmem:[#allocation5 + $0x30] sm:$0xff]
    %v205 = vld [vmem:[#allocation5 + $0x38] sm:$0xff]
    %v206 = vld [vmem:[#allocation5 + $0x40] sm:$0xff]
    %v207 = vld [vmem:[#allocation5 + $0x48] sm:$0xff]
    %v208 = vld [vmem:[#allocation5 + $0x50] sm:$0xff]
    %v209 = vld [vmem:[#allocation5 + $0x58] sm:$0xff]
    %v210 = vld [vmem:[#allocation5 + $0x60] sm:$0xff]
    %v211 = vld [vmem:[#allocation5 + $0x68] sm:$0xff]
    %v212 = vld [vmem:[#allocation5 + $0x70] sm:$0xff]
    %v213 = vld [vmem:[#allocation5 + $0x78] sm:$0xff]
    %v214 = vld [vmem:[#allocation7] sm:$0xff]
    %v216 = vperm.slane %v214, 0
    %v217 = vperm.slane %v214, 1
    %v218 = vperm.slane %v214, 2
    %v219 = vperm.slane %v214, 3
    %v220 = vperm.slane %v214, 4
    %v221 = vperm.slane %v214, 5
    %v222 = vperm.slane %v214, 6
    %v223 = vperm.slane %v214, 7
    %v248 = vunpack.c.l.b16 %v198
    %v249 = vunpack.c.h.b16 %v198
    %v250 = vunpack.c.l.b16 %v199
    %v251 = vunpack.c.h.b16 %v199
    %v252 = vunpack.c.l.b16 %v200
    %v253 = vunpack.c.h.b16 %v200
    %v254 = vunpack.c.l.b16 %v201
    %v255 = vunpack.c.h.b16 %v201
    %v256 = vunpack.c.l.b16 %v202
    %v257 = vunpack.c.h.b16 %v202
    %v258 = vunpack.c.l.b16 %v203
    %v259 = vunpack.c.h.b16 %v203
    %v260 = vunpack.c.l.b16 %v204
    %v261 = vunpack.c.h.b16 %v204
    %v262 = vunpack.c.l.b16 %v205
    %v263 = vunpack.c.h.b16 %v205
    %v264 = vunpack.c.l.b16 %v206
    %v265 = vunpack.c.h.b16 %v206
    %v266 = vunpack.c.l.b16 %v207
    %v267 = vunpack.c.h.b16 %v207
    %v268 = vunpack.c.l.b16 %v208
    %v269 = vunpack.c.h.b16 %v208
    %v270 = vunpack.c.l.b16 %v209
    %v271 = vunpack.c.h.b16 %v209
    %v272 = vunpack.c.l.b16 %v210
    %v273 = vunpack.c.h.b16 %v210
    %v274 = vunpack.c.l.b16 %v211
    %v275 = vunpack.c.h.b16 %v211
    %v276 = vunpack.c.l.b16 %v212
    %v277 = vunpack.c.h.b16 %v212
    %v278 = vunpack.c.l.b16 %v213
    %v279 = vunpack.c.h.b16 %v213
    %v280 = vpack.c.b16 %v256, %v248
    %v281 = vpack.c.b16 %v257, %v249
    %v282 = vpack.c.b16 %v258, %v250
    %v283 = vpack.c.b16 %v259, %v251
    %v284 = vpack.c.b16 %v260, %v252
    %v285 = vpack.c.b16 %v261, %v253
    %v286 = vpack.c.b16 %v262, %v254
    %v287 = vpack.c.b16 %v263, %v255
    %v288 = vpack.c.b16 %v272, %v264
    %v289 = vpack.c.b16 %v273, %v265
    %v290 = vpack.c.b16 %v274, %v266
    %v291 = vpack.c.b16 %v275, %v267
    %v292 = vpack.c.b16 %v276, %v268
    %v293 = vpack.c.b16 %v277, %v269
    %v294 = vpack.c.b16 %v278, %v270
    %v295 = vpack.c.b16 %v279, %v271
    %vm312 = vcmask 261120
    %v314 = vsel %vm312, %v197, 0
    %316 = vmatpush.bf16.msra.mxu0 0
    %317 = vmatpush.bf16.msra.mxu0 0
    %318 = vmatpush.bf16.msra.mxu0 0
    %319 = vmatpush.bf16.msra.mxu0 0
    %320 = vmatpush.bf16.msra.mxu0 0
    %321 = vmatpush.bf16.msra.mxu0 0
    %322 = vmatpush.bf16.msra.mxu0 %v288
    %323 = vmatpush.bf16.msra.mxu0 %v280
    %324 = vmatmul.bf16.gmra.mxu0 %v314
    %v325 = vpop.f32.mrf.mxu0
    %v326 = vadd.f32 %v216, %v325
    %v327 = vpop.f32.mrf.mxu0
    %328 = vdwg.mxu0
    %329 = vmatpush.bf16.msra.mxu0 0
    %330 = vmatpush.bf16.msra.mxu0 0
    %331 = vmatpush.bf16.msra.mxu0 0
    %332 = vmatpush.bf16.msra.mxu0 0
    %333 = vmatpush.bf16.msra.mxu0 0
    %334 = vmatpush.bf16.msra.mxu0 0
    %335 = vmatpush.bf16.msra.mxu0 %v289
    %336 = vmatpush.bf16.msra.mxu0 %v281
    %337 = vmatmul.bf16.gmra.mxu0 %v314
    %v338 = vpop.f32.mrf.mxu0
    %v339 = vadd.f32 %v217, %v338
    %v340 = vpop.f32.mrf.mxu0
    %341 = vdwg.mxu0
    %342 = vmatpush.bf16.msra.mxu0 0
    %343 = vmatpush.bf16.msra.mxu0 0
    %344 = vmatpush.bf16.msra.mxu0 0
    %345 = vmatpush.bf16.msra.mxu0 0
    %346 = vmatpush.bf16.msra.mxu0 0
    %347 = vmatpush.bf16.msra.mxu0 0
    %348 = vmatpush.bf16.msra.mxu0 %v290
    %349 = vmatpush.bf16.msra.mxu0 %v282
    %350 = vmatmul.bf16.gmra.mxu0 %v314
    %v351 = vpop.f32.mrf.mxu0
    %v352 = vadd.f32 %v218, %v351
    %v353 = vpop.f32.mrf.mxu0
    %354 = vdwg.mxu0
    %355 = vmatpush.bf16.msra.mxu0 0
    %356 = vmatpush.bf16.msra.mxu0 0
    %357 = vmatpush.bf16.msra.mxu0 0
    %358 = vmatpush.bf16.msra.mxu0 0
    %359 = vmatpush.bf16.msra.mxu0 0
    %360 = vmatpush.bf16.msra.mxu0 0
    %361 = vmatpush.bf16.msra.mxu0 %v291
    %362 = vmatpush.bf16.msra.mxu0 %v283
    %363 = vmatmul.bf16.gmra.mxu0 %v314
    %v364 = vpop.f32.mrf.mxu0
    %v365 = vadd.f32 %v219, %v364
    %v366 = vpop.f32.mrf.mxu0
    %367 = vdwg.mxu0
    %368 = vmatpush.bf16.msra.mxu0 0
    %369 = vmatpush.bf16.msra.mxu0 0
    %370 = vmatpush.bf16.msra.mxu0 0
    %371 = vmatpush.bf16.msra.mxu0 0
    %372 = vmatpush.bf16.msra.mxu0 0
    %373 = vmatpush.bf16.msra.mxu0 0
    %374 = vmatpush.bf16.msra.mxu0 %v292
    %375 = vmatpush.bf16.msra.mxu0 %v284
    %376 = vmatmul.bf16.gmra.mxu0 %v314
    %v377 = vpop.f32.mrf.mxu0
    %v378 = vadd.f32 %v220, %v377
    %v379 = vpop.f32.mrf.mxu0
    %380 = vdwg.mxu0
    %381 = vmatpush.bf16.msra.mxu0 0
    %382 = vmatpush.bf16.msra.mxu0 0
    %383 = vmatpush.bf16.msra.mxu0 0
    %384 = vmatpush.bf16.msra.mxu0 0
    %385 = vmatpush.bf16.msra.mxu0 0
    %386 = vmatpush.bf16.msra.mxu0 0
    %387 = vmatpush.bf16.msra.mxu0 %v293
    %388 = vmatpush.bf16.msra.mxu0 %v285
    %389 = vmatmul.bf16.gmra.mxu0 %v314
    %v390 = vpop.f32.mrf.mxu0
    %v391 = vadd.f32 %v221, %v390
    %v392 = vpop.f32.mrf.mxu0
    %393 = vdwg.mxu0
    %394 = vmatpush.bf16.msra.mxu0 0
    %395 = vmatpush.bf16.msra.mxu0 0
    %396 = vmatpush.bf16.msra.mxu0 0
    %397 = vmatpush.bf16.msra.mxu0 0
    %398 = vmatpush.bf16.msra.mxu0 0
    %399 = vmatpush.bf16.msra.mxu0 0
    %400 = vmatpush.bf16.msra.mxu0 %v294
    %401 = vmatpush.bf16.msra.mxu0 %v286
    %402 = vmatmul.bf16.gmra.mxu0 %v314
    %v403 = vpop.f32.mrf.mxu0
    %v404 = vadd.f32 %v222, %v403
    %v405 = vpop.f32.mrf.mxu0
    %406 = vdwg.mxu0
    %407 = vmatpush.bf16.msra.mxu0 0
    %408 = vmatpush.bf16.msra.mxu0 0
    %409 = vmatpush.bf16.msra.mxu0 0
    %410 = vmatpush.bf16.msra.mxu0 0
    %411 = vmatpush.bf16.msra.mxu0 0
    %412 = vmatpush.bf16.msra.mxu0 0
    %413 = vmatpush.bf16.msra.mxu0 %v295
    %414 = vmatpush.bf16.msra.mxu0 %v287
    %415 = vmatmul.bf16.gmra.mxu0 %v314
    %v416 = vpop.f32.mrf.mxu0
    %v417 = vadd.f32 %v223, %v416
    %v418 = vpop.f32.mrf.mxu0
    %419 = vdwg.mxu0
    %v420 = vld [vmem:[#allocation8] sm:$0xff]
    %v421 = vld [vmem:[#allocation10] sm:$0xff]
    %v422 = vadd.f32 %v326, %v339
    %v423 = vadd.f32 %v422, %v352
    %v424 = vadd.f32 %v423, %v365
    %v425 = vadd.f32 %v424, %v378
    %v426 = vadd.f32 %v425, %v391
    %v427 = vadd.f32 %v426, %v404
    %v428 = vadd.f32 %v427, %v417
    %429 = vadd.xlane.f32.xlu0 %v428
    %v430 = vpop.xlane.xlu0 %429
    %v431 = vrcp.pop 1024.0
    %v432 = vmul.f32 1024.0, %v431
    %v433 = vsub.f32 1.0, %v432
    %v434 = vmul.f32 %v431, %v433
    %v435 = vadd.f32 %v431, %v434
    %vm436 = vweird.f32 %v431
    %v437 = vsel %vm436, %v431, %v435
    %v438 = vmul.f32 %v430, %v437
    %v439 = vsub.f32 %v326, %v438
    %v440 = vsub.f32 %v339, %v438
    %v441 = vsub.f32 %v352, %v438
    %v442 = vsub.f32 %v365, %v438
    %v443 = vsub.f32 %v378, %v438
    %v444 = vsub.f32 %v391, %v438
    %v445 = vsub.f32 %v404, %v438
    %v446 = vsub.f32 %v417, %v438
    %v447 = vmul.f32 %v439, %v439
    %v448 = vmul.f32 %v440, %v440
    %v449 = vmul.f32 %v441, %v441
    %v450 = vmul.f32 %v442, %v442
    %v451 = vmul.f32 %v443, %v443
    %v452 = vmul.f32 %v444, %v444
    %v453 = vmul.f32 %v445, %v445
    %v454 = vmul.f32 %v446, %v446
    %v455 = vadd.f32 %v447, %v448
    %v456 = vadd.f32 %v455, %v449
    %v457 = vadd.f32 %v456, %v450
    %v458 = vadd.f32 %v457, %v451
    %v459 = vadd.f32 %v458, %v452
    %v460 = vadd.f32 %v459, %v453
    %v461 = vadd.f32 %v460, %v454
    %462 = vadd.xlane.f32.xlu0 %v461
    %v463 = vpop.xlane.xlu0 %462
    %v464 = vmul.f32 %v463, %v437
    %v465 = vadd.f32 %v464, 1e-05
    %v466 = vrsqrt.pop %v465
    %v467 = vmul.f32 %v466, %v465
    %v468 = vmul.f32 %v467, %v466
    %v469 = vmul.f32 0.5, %v468
    %v470 = vsub.f32 1.5, %v469
    %v471 = vmul.f32 %v466, %v470
    %vm472 = vweird.f32 %v465
    %vm473 = vweird.f32 %v466
    %vm474 = vmor %vm472, %vm473
    %v475 = vsel %vm474, %v466, %v471
    %v476 = vmul.f32 %v439, %v475
    %v477 = vmul.f32 %v440, %v475
    %v478 = vmul.f32 %v441, %v475
    %v479 = vmul.f32 %v442, %v475
    %v480 = vmul.f32 %v443, %v475
    %v481 = vmul.f32 %v444, %v475
    %v482 = vmul.f32 %v445, %v475
    %v483 = vmul.f32 %v446, %v475
    %v485 = vperm.slane %v420, 0
    %v486 = vperm.slane %v420, 1
    %v487 = vperm.slane %v420, 2
    %v488 = vperm.slane %v420, 3
    %v489 = vperm.slane %v420, 4
    %v490 = vperm.slane %v420, 5
    %v491 = vperm.slane %v420, 6
    %v492 = vperm.slane %v420, 7
    %v501 = vmul.f32 %v476, %v485
    %v502 = vmul.f32 %v477, %v486
    %v503 = vmul.f32 %v478, %v487
    %v504 = vmul.f32 %v479, %v488
    %v505 = vmul.f32 %v480, %v489
    %v506 = vmul.f32 %v481, %v490
    %v507 = vmul.f32 %v482, %v491
    %v508 = vmul.f32 %v483, %v492
    %v510 = vperm.slane %v421, 0
    %v511 = vperm.slane %v421, 1
    %v512 = vperm.slane %v421, 2
    %v513 = vperm.slane %v421, 3
    %v514 = vperm.slane %v421, 4
    %v515 = vperm.slane %v421, 5
    %v516 = vperm.slane %v421, 6
    %v517 = vperm.slane %v421, 7
    %v526 = vadd.f32 %v501, %v510
    %v527 = vadd.f32 %v502, %v511
    %v528 = vadd.f32 %v503, %v512
    %v529 = vadd.f32 %v504, %v513
    %v530 = vadd.f32 %v505, %v514
    %v531 = vadd.f32 %v506, %v515
    %v532 = vadd.f32 %v507, %v516
    %v533 = vadd.f32 %v508, %v517
    %v534 = vmax.f32 %v526, 0.0
    %v535 = vmax.f32 %v527, 0.0
    %v536 = vmax.f32 %v528, 0.0
    %v537 = vmax.f32 %v529, 0.0
    %v538 = vmax.f32 %v530, 0.0
    %v539 = vmax.f32 %v531, 0.0
    %v540 = vmax.f32 %v532, 0.0
    %v541 = vmax.f32 %v533, 0.0
    %v542 = vpack.c.bf16 %v534, %v534
    %v543 = vpack.c.bf16 %v535, %v535
    %v544 = vpack.c.bf16 %v536, %v536
    %v545 = vpack.c.bf16 %v537, %v537
    %v546 = vpack.c.bf16 %v538, %v538
    %v547 = vpack.c.bf16 %v539, %v539
    %v548 = vpack.c.bf16 %v540, %v540
    %v549 = vpack.c.bf16 %v541, %v541
    %v550 = vld [vmem:[#allocation11] sm:$0xff]
    %v551 = vld [vmem:[#allocation11 + $0x8] sm:$0xff]
    %v552 = vld [vmem:[#allocation11 + $0x10] sm:$0xff]
    %v553 = vld [vmem:[#allocation11 + $0x18] sm:$0xff]
    %v554 = vld [vmem:[#allocation11 + $0x20] sm:$0xff]
    %v555 = vld [vmem:[#allocation11 + $0x28] sm:$0xff]
    %v556 = vld [vmem:[#allocation11 + $0x30] sm:$0xff]
    %v557 = vld [vmem:[#allocation11 + $0x38] sm:$0xff]
    %v558 = vld [vmem:[#allocation11 + $0x40] sm:$0xff]
    %v559 = vld [vmem:[#allocation11 + $0x48] sm:$0xff]
    %v560 = vld [vmem:[#allocation11 + $0x50] sm:$0xff]
    %v561 = vld [vmem:[#allocation11 + $0x58] sm:$0xff]
    %v562 = vld [vmem:[#allocation11 + $0x60] sm:$0xff]
    %v563 = vld [vmem:[#allocation11 + $0x68] sm:$0xff]
    %v564 = vld [vmem:[#allocation11 + $0x70] sm:$0xff]
    %v565 = vld [vmem:[#allocation11 + $0x78] sm:$0xff]
    %v566 = vld [vmem:[#allocation11 + $0x80] sm:$0xff]
    %v567 = vld [vmem:[#allocation11 + $0x88] sm:$0xff]
    %v568 = vld [vmem:[#allocation11 + $0x90] sm:$0xff]
    %v569 = vld [vmem:[#allocation11 + $0x98] sm:$0xff]
    %v570 = vld [vmem:[#allocation11 + $0xa0] sm:$0xff]
    %v571 = vld [vmem:[#allocation11 + $0xa8] sm:$0xff]
    %v572 = vld [vmem:[#allocation11 + $0xb0] sm:$0xff]
    %v573 = vld [vmem:[#allocation11 + $0xb8] sm:$0xff]
    %v574 = vld [vmem:[#allocation11 + $0xc0] sm:$0xff]
    %v575 = vld [vmem:[#allocation11 + $0xc8] sm:$0xff]
    %v576 = vld [vmem:[#allocation11 + $0xd0] sm:$0xff]
    %v577 = vld [vmem:[#allocation11 + $0xd8] sm:$0xff]
    %v578 = vld [vmem:[#allocation11 + $0xe0] sm:$0xff]
    %v579 = vld [vmem:[#allocation11 + $0xe8] sm:$0xff]
    %v580 = vld [vmem:[#allocation11 + $0xf0] sm:$0xff]
    %v581 = vld [vmem:[#allocation11 + $0xf8] sm:$0xff]
    %v582 = vld [vmem:[#allocation11 + $0x100] sm:$0xff]
    %v583 = vld [vmem:[#allocation11 + $0x108] sm:$0xff]
    %v584 = vld [vmem:[#allocation11 + $0x110] sm:$0xff]
    %v585 = vld [vmem:[#allocation11 + $0x118] sm:$0xff]
    %v586 = vld [vmem:[#allocation11 + $0x120] sm:$0xff]
    %v587 = vld [vmem:[#allocation11 + $0x128] sm:$0xff]
    %v588 = vld [vmem:[#allocation11 + $0x130] sm:$0xff]
    %v589 = vld [vmem:[#allocation11 + $0x138] sm:$0xff]
    %v590 = vld [vmem:[#allocation11 + $0x140] sm:$0xff]
    %v591 = vld [vmem:[#allocation11 + $0x148] sm:$0xff]
    %v592 = vld [vmem:[#allocation11 + $0x150] sm:$0xff]
    %v593 = vld [vmem:[#allocation11 + $0x158] sm:$0xff]
    %v594 = vld [vmem:[#allocation11 + $0x160] sm:$0xff]
    %v595 = vld [vmem:[#allocation11 + $0x168] sm:$0xff]
    %v596 = vld [vmem:[#allocation11 + $0x170] sm:$0xff]
    %v597 = vld [vmem:[#allocation11 + $0x178] sm:$0xff]
    %v598 = vld [vmem:[#allocation11 + $0x180] sm:$0xff]
    %v599 = vld [vmem:[#allocation11 + $0x188] sm:$0xff]
    %v600 = vld [vmem:[#allocation11 + $0x190] sm:$0xff]
    %v601 = vld [vmem:[#allocation11 + $0x198] sm:$0xff]
    %v602 = vld [vmem:[#allocation11 + $0x1a0] sm:$0xff]
    %v603 = vld [vmem:[#allocation11 + $0x1a8] sm:$0xff]
    %v604 = vld [vmem:[#allocation11 + $0x1b0] sm:$0xff]
    %v605 = vld [vmem:[#allocation11 + $0x1b8] sm:$0xff]
    %v606 = vld [vmem:[#allocation11 + $0x1c0] sm:$0xff]
    %v607 = vld [vmem:[#allocation11 + $0x1c8] sm:$0xff]
    %v608 = vld [vmem:[#allocation11 + $0x1d0] sm:$0xff]
    %v609 = vld [vmem:[#allocation11 + $0x1d8] sm:$0xff]
    %v610 = vld [vmem:[#allocation11 + $0x1e0] sm:$0xff]
    %v611 = vld [vmem:[#allocation11 + $0x1e8] sm:$0xff]
    %v612 = vld [vmem:[#allocation11 + $0x1f0] sm:$0xff]
    %v613 = vld [vmem:[#allocation11 + $0x1f8] sm:$0xff]
    %v614 = vld [vmem:[#allocation11 + $0x200] sm:$0xff]
    %v615 = vld [vmem:[#allocation11 + $0x208] sm:$0xff]
    %v616 = vld [vmem:[#allocation11 + $0x210] sm:$0xff]
    %v617 = vld [vmem:[#allocation11 + $0x218] sm:$0xff]
    %v618 = vld [vmem:[#allocation11 + $0x220] sm:$0xff]
    %v619 = vld [vmem:[#allocation11 + $0x228] sm:$0xff]
    %v620 = vld [vmem:[#allocation11 + $0x230] sm:$0xff]
    %v621 = vld [vmem:[#allocation11 + $0x238] sm:$0xff]
    %v622 = vld [vmem:[#allocation11 + $0x240] sm:$0xff]
    %v623 = vld [vmem:[#allocation11 + $0x248] sm:$0xff]
    %v624 = vld [vmem:[#allocation11 + $0x250] sm:$0xff]
    %v625 = vld [vmem:[#allocation11 + $0x258] sm:$0xff]
    %v626 = vld [vmem:[#allocation11 + $0x260] sm:$0xff]
    %v627 = vld [vmem:[#allocation11 + $0x268] sm:$0xff]
    %v628 = vld [vmem:[#allocation11 + $0x270] sm:$0xff]
    %v629 = vld [vmem:[#allocation11 + $0x278] sm:$0xff]
    %v630 = vld [vmem:[#allocation11 + $0x280] sm:$0xff]
    %v631 = vld [vmem:[#allocation11 + $0x288] sm:$0xff]
    %v632 = vld [vmem:[#allocation11 + $0x290] sm:$0xff]
    %v633 = vld [vmem:[#allocation11 + $0x298] sm:$0xff]
    %v634 = vld [vmem:[#allocation11 + $0x2a0] sm:$0xff]
    %v635 = vld [vmem:[#allocation11 + $0x2a8] sm:$0xff]
    %v636 = vld [vmem:[#allocation11 + $0x2b0] sm:$0xff]
    %v637 = vld [vmem:[#allocation11 + $0x2b8] sm:$0xff]
    %v638 = vld [vmem:[#allocation11 + $0x2c0] sm:$0xff]
    %v639 = vld [vmem:[#allocation11 + $0x2c8] sm:$0xff]
    %v640 = vld [vmem:[#allocation11 + $0x2d0] sm:$0xff]
    %v641 = vld [vmem:[#allocation11 + $0x2d8] sm:$0xff]
    %v642 = vld [vmem:[#allocation11 + $0x2e0] sm:$0xff]
    %v643 = vld [vmem:[#allocation11 + $0x2e8] sm:$0xff]
    %v644 = vld [vmem:[#allocation11 + $0x2f0] sm:$0xff]
    %v645 = vld [vmem:[#allocation11 + $0x2f8] sm:$0xff]
    %v646 = vld [vmem:[#allocation11 + $0x300] sm:$0xff]
    %v647 = vld [vmem:[#allocation11 + $0x308] sm:$0xff]
    %v648 = vld [vmem:[#allocation11 + $0x310] sm:$0xff]
    %v649 = vld [vmem:[#allocation11 + $0x318] sm:$0xff]
    %v650 = vld [vmem:[#allocation11 + $0x320] sm:$0xff]
    %v651 = vld [vmem:[#allocation11 + $0x328] sm:$0xff]
    %v652 = vld [vmem:[#allocation11 + $0x330] sm:$0xff]
    %v653 = vld [vmem:[#allocation11 + $0x338] sm:$0xff]
    %v654 = vld [vmem:[#allocation11 + $0x340] sm:$0xff]
    %v655 = vld [vmem:[#allocation11 + $0x348] sm:$0xff]
    %v656 = vld [vmem:[#allocation11 + $0x350] sm:$0xff]
    %v657 = vld [vmem:[#allocation11 + $0x358] sm:$0xff]
    %v658 = vld [vmem:[#allocation11 + $0x360] sm:$0xff]
    %v659 = vld [vmem:[#allocation11 + $0x368] sm:$0xff]
    %v660 = vld [vmem:[#allocation11 + $0x370] sm:$0xff]
    %v661 = vld [vmem:[#allocation11 + $0x378] sm:$0xff]
    %v662 = vld [vmem:[#allocation11 + $0x380] sm:$0xff]
    %v663 = vld [vmem:[#allocation11 + $0x388] sm:$0xff]
    %v664 = vld [vmem:[#allocation11 + $0x390] sm:$0xff]
    %v665 = vld [vmem:[#allocation11 + $0x398] sm:$0xff]
    %v666 = vld [vmem:[#allocation11 + $0x3a0] sm:$0xff]
    %v667 = vld [vmem:[#allocation11 + $0x3a8] sm:$0xff]
    %v668 = vld [vmem:[#allocation11 + $0x3b0] sm:$0xff]
    %v669 = vld [vmem:[#allocation11 + $0x3b8] sm:$0xff]
    %v670 = vld [vmem:[#allocation11 + $0x3c0] sm:$0xff]
    %v671 = vld [vmem:[#allocation11 + $0x3c8] sm:$0xff]
    %v672 = vld [vmem:[#allocation11 + $0x3d0] sm:$0xff]
    %v673 = vld [vmem:[#allocation11 + $0x3d8] sm:$0xff]
    %v674 = vld [vmem:[#allocation11 + $0x3e0] sm:$0xff]
    %v675 = vld [vmem:[#allocation11 + $0x3e8] sm:$0xff]
    %v676 = vld [vmem:[#allocation11 + $0x3f0] sm:$0xff]
    %v677 = vld [vmem:[#allocation11 + $0x3f8] sm:$0xff]
    %v678 = vld [vmem:[#allocation11 + $0x400] sm:$0xff]
    %v679 = vld [vmem:[#allocation11 + $0x408] sm:$0xff]
    %v680 = vld [vmem:[#allocation11 + $0x410] sm:$0xff]
    %v681 = vld [vmem:[#allocation11 + $0x418] sm:$0xff]
    %v682 = vld [vmem:[#allocation11 + $0x420] sm:$0xff]
    %v683 = vld [vmem:[#allocation11 + $0x428] sm:$0xff]
    %v684 = vld [vmem:[#allocation11 + $0x430] sm:$0xff]
    %v685 = vld [vmem:[#allocation11 + $0x438] sm:$0xff]
    %v686 = vld [vmem:[#allocation11 + $0x440] sm:$0xff]
    %v687 = vld [vmem:[#allocation11 + $0x448] sm:$0xff]
    %v688 = vld [vmem:[#allocation11 + $0x450] sm:$0xff]
    %v689 = vld [vmem:[#allocation11 + $0x458] sm:$0xff]
    %v690 = vld [vmem:[#allocation11 + $0x460] sm:$0xff]
    %v691 = vld [vmem:[#allocation11 + $0x468] sm:$0xff]
    %v692 = vld [vmem:[#allocation11 + $0x470] sm:$0xff]
    %v693 = vld [vmem:[#allocation11 + $0x478] sm:$0xff]
    %v694 = vld [vmem:[#allocation11 + $0x480] sm:$0xff]
    %v695 = vld [vmem:[#allocation11 + $0x488] sm:$0xff]
    %v696 = vld [vmem:[#allocation11 + $0x490] sm:$0xff]
    %v697 = vld [vmem:[#allocation11 + $0x498] sm:$0xff]
    %v698 = vld [vmem:[#allocation11 + $0x4a0] sm:$0xff]
    %v699 = vld [vmem:[#allocation11 + $0x4a8] sm:$0xff]
    %v700 = vld [vmem:[#allocation11 + $0x4b0] sm:$0xff]
    %v701 = vld [vmem:[#allocation11 + $0x4b8] sm:$0xff]
    %v702 = vld [vmem:[#allocation11 + $0x4c0] sm:$0xff]
    %v703 = vld [vmem:[#allocation11 + $0x4c8] sm:$0xff]
    %v704 = vld [vmem:[#allocation11 + $0x4d0] sm:$0xff]
    %v705 = vld [vmem:[#allocation11 + $0x4d8] sm:$0xff]
    %v706 = vld [vmem:[#allocation11 + $0x4e0] sm:$0xff]
    %v707 = vld [vmem:[#allocation11 + $0x4e8] sm:$0xff]
    %v708 = vld [vmem:[#allocation11 + $0x4f0] sm:$0xff]
    %v709 = vld [vmem:[#allocation11 + $0x4f8] sm:$0xff]
    %v710 = vld [vmem:[#allocation11 + $0x500] sm:$0xff]
    %v711 = vld [vmem:[#allocation11 + $0x508] sm:$0xff]
    %v712 = vld [vmem:[#allocation11 + $0x510] sm:$0xff]
    %v713 = vld [vmem:[#allocation11 + $0x518] sm:$0xff]
    %v714 = vld [vmem:[#allocation11 + $0x520] sm:$0xff]
    %v715 = vld [vmem:[#allocation11 + $0x528] sm:$0xff]
    %v716 = vld [vmem:[#allocation11 + $0x530] sm:$0xff]
    %v717 = vld [vmem:[#allocation11 + $0x538] sm:$0xff]
    %v718 = vld [vmem:[#allocation11 + $0x540] sm:$0xff]
    %v719 = vld [vmem:[#allocation11 + $0x548] sm:$0xff]
    %v720 = vld [vmem:[#allocation11 + $0x550] sm:$0xff]
    %v721 = vld [vmem:[#allocation11 + $0x558] sm:$0xff]
    %v722 = vld [vmem:[#allocation11 + $0x560] sm:$0xff]
    %v723 = vld [vmem:[#allocation11 + $0x568] sm:$0xff]
    %v724 = vld [vmem:[#allocation11 + $0x570] sm:$0xff]
    %v725 = vld [vmem:[#allocation11 + $0x578] sm:$0xff]
    %v726 = vld [vmem:[#allocation11 + $0x580] sm:$0xff]
    %v727 = vld [vmem:[#allocation11 + $0x588] sm:$0xff]
    %v728 = vld [vmem:[#allocation11 + $0x590] sm:$0xff]
    %v729 = vld [vmem:[#allocation11 + $0x598] sm:$0xff]
    %v730 = vld [vmem:[#allocation11 + $0x5a0] sm:$0xff]
    %v731 = vld [vmem:[#allocation11 + $0x5a8] sm:$0xff]
    %v732 = vld [vmem:[#allocation11 + $0x5b0] sm:$0xff]
    %v733 = vld [vmem:[#allocation11 + $0x5b8] sm:$0xff]
    %v734 = vld [vmem:[#allocation11 + $0x5c0] sm:$0xff]
    %v735 = vld [vmem:[#allocation11 + $0x5c8] sm:$0xff]
    %v736 = vld [vmem:[#allocation11 + $0x5d0] sm:$0xff]
    %v737 = vld [vmem:[#allocation11 + $0x5d8] sm:$0xff]
    %v738 = vld [vmem:[#allocation11 + $0x5e0] sm:$0xff]
    %v739 = vld [vmem:[#allocation11 + $0x5e8] sm:$0xff]
    %v740 = vld [vmem:[#allocation11 + $0x5f0] sm:$0xff]
    %v741 = vld [vmem:[#allocation11 + $0x5f8] sm:$0xff]
    %v742 = vld [vmem:[#allocation11 + $0x600] sm:$0xff]
    %v743 = vld [vmem:[#allocation11 + $0x608] sm:$0xff]
    %v744 = vld [vmem:[#allocation11 + $0x610] sm:$0xff]
    %v745 = vld [vmem:[#allocation11 + $0x618] sm:$0xff]
    %v746 = vld [vmem:[#allocation11 + $0x620] sm:$0xff]
    %v747 = vld [vmem:[#allocation11 + $0x628] sm:$0xff]
    %v748 = vld [vmem:[#allocation11 + $0x630] sm:$0xff]
    %v749 = vld [vmem:[#allocation11 + $0x638] sm:$0xff]
    %v750 = vld [vmem:[#allocation11 + $0x640] sm:$0xff]
    %v751 = vld [vmem:[#allocation11 + $0x648] sm:$0xff]
    %v752 = vld [vmem:[#allocation11 + $0x650] sm:$0xff]
    %v753 = vld [vmem:[#allocation11 + $0x658] sm:$0xff]
    %v754 = vld [vmem:[#allocation11 + $0x660] sm:$0xff]
    %v755 = vld [vmem:[#allocation11 + $0x668] sm:$0xff]
    %v756 = vld [vmem:[#allocation11 + $0x670] sm:$0xff]
    %v757 = vld [vmem:[#allocation11 + $0x678] sm:$0xff]
    %v758 = vld [vmem:[#allocation11 + $0x680] sm:$0xff]
    %v759 = vld [vmem:[#allocation11 + $0x688] sm:$0xff]
    %v760 = vld [vmem:[#allocation11 + $0x690] sm:$0xff]
    %v761 = vld [vmem:[#allocation11 + $0x698] sm:$0xff]
    %v762 = vld [vmem:[#allocation11 + $0x6a0] sm:$0xff]
    %v763 = vld [vmem:[#allocation11 + $0x6a8] sm:$0xff]
    %v764 = vld [vmem:[#allocation11 + $0x6b0] sm:$0xff]
    %v765 = vld [vmem:[#allocation11 + $0x6b8] sm:$0xff]
    %v766 = vld [vmem:[#allocation11 + $0x6c0] sm:$0xff]
    %v767 = vld [vmem:[#allocation11 + $0x6c8] sm:$0xff]
    %v768 = vld [vmem:[#allocation11 + $0x6d0] sm:$0xff]
    %v769 = vld [vmem:[#allocation11 + $0x6d8] sm:$0xff]
    %v770 = vld [vmem:[#allocation11 + $0x6e0] sm:$0xff]
    %v771 = vld [vmem:[#allocation11 + $0x6e8] sm:$0xff]
    %v772 = vld [vmem:[#allocation11 + $0x6f0] sm:$0xff]
    %v773 = vld [vmem:[#allocation11 + $0x6f8] sm:$0xff]
    %v774 = vld [vmem:[#allocation11 + $0x700] sm:$0xff]
    %v775 = vld [vmem:[#allocation11 + $0x708] sm:$0xff]
    %v776 = vld [vmem:[#allocation11 + $0x710] sm:$0xff]
    %v777 = vld [vmem:[#allocation11 + $0x718] sm:$0xff]
    %v778 = vld [vmem:[#allocation11 + $0x720] sm:$0xff]
    %v779 = vld [vmem:[#allocation11 + $0x728] sm:$0xff]
    %v780 = vld [vmem:[#allocation11 + $0x730] sm:$0xff]
    %v781 = vld [vmem:[#allocation11 + $0x738] sm:$0xff]
    %v782 = vld [vmem:[#allocation11 + $0x740] sm:$0xff]
    %v783 = vld [vmem:[#allocation11 + $0x748] sm:$0xff]
    %v784 = vld [vmem:[#allocation11 + $0x750] sm:$0xff]
    %v785 = vld [vmem:[#allocation11 + $0x758] sm:$0xff]
    %v786 = vld [vmem:[#allocation11 + $0x760] sm:$0xff]
    %v787 = vld [vmem:[#allocation11 + $0x768] sm:$0xff]
    %v788 = vld [vmem:[#allocation11 + $0x770] sm:$0xff]
    %v789 = vld [vmem:[#allocation11 + $0x778] sm:$0xff]
    %v790 = vld [vmem:[#allocation11 + $0x780] sm:$0xff]
    %v791 = vld [vmem:[#allocation11 + $0x788] sm:$0xff]
    %v792 = vld [vmem:[#allocation11 + $0x790] sm:$0xff]
    %v793 = vld [vmem:[#allocation11 + $0x798] sm:$0xff]
    %v794 = vld [vmem:[#allocation11 + $0x7a0] sm:$0xff]
    %v795 = vld [vmem:[#allocation11 + $0x7a8] sm:$0xff]
    %v796 = vld [vmem:[#allocation11 + $0x7b0] sm:$0xff]
    %v797 = vld [vmem:[#allocation11 + $0x7b8] sm:$0xff]
    %v798 = vld [vmem:[#allocation11 + $0x7c0] sm:$0xff]
    %v799 = vld [vmem:[#allocation11 + $0x7c8] sm:$0xff]
    %v800 = vld [vmem:[#allocation11 + $0x7d0] sm:$0xff]
    %v801 = vld [vmem:[#allocation11 + $0x7d8] sm:$0xff]
    %v802 = vld [vmem:[#allocation11 + $0x7e0] sm:$0xff]
    %v803 = vld [vmem:[#allocation11 + $0x7e8] sm:$0xff]
    %v804 = vld [vmem:[#allocation11 + $0x7f0] sm:$0xff]
    %v805 = vld [vmem:[#allocation11 + $0x7f8] sm:$0xff]
    %v806 = vld [vmem:[%s6] sm:$0xf]
    %v808 = vperm.slane %v806, 0
    %v809 = vperm.slane %v806, 1
    %v810 = vperm.slane %v806, 2
    %v811 = vperm.slane %v806, 3
    %v1072 = vunpack.c.l.b16 %v550
    %v1073 = vunpack.c.h.b16 %v550
    %v1074 = vunpack.c.l.b16 %v551
    %v1075 = vunpack.c.h.b16 %v551
    %v1076 = vunpack.c.l.b16 %v552
    %v1077 = vunpack.c.h.b16 %v552
    %v1078 = vunpack.c.l.b16 %v553
    %v1079 = vunpack.c.h.b16 %v553
    %v1080 = vunpack.c.l.b16 %v554
    %v1081 = vunpack.c.h.b16 %v554
    %v1082 = vunpack.c.l.b16 %v555
    %v1083 = vunpack.c.h.b16 %v555
    %v1084 = vunpack.c.l.b16 %v556
    %v1085 = vunpack.c.h.b16 %v556
    %v1086 = vunpack.c.l.b16 %v557
    %v1087 = vunpack.c.h.b16 %v557
    %v1088 = vunpack.c.l.b16 %v558
    %v1089 = vunpack.c.h.b16 %v558
    %v1090 = vunpack.c.l.b16 %v559
    %v1091 = vunpack.c.h.b16 %v559
    %v1092 = vunpack.c.l.b16 %v560
    %v1093 = vunpack.c.h.b16 %v560
    %v1094 = vunpack.c.l.b16 %v561
    %v1095 = vunpack.c.h.b16 %v561
    %v1096 = vunpack.c.l.b16 %v562
    %v1097 = vunpack.c.h.b16 %v562
    %v1098 = vunpack.c.l.b16 %v563
    %v1099 = vunpack.c.h.b16 %v563
    %v1100 = vunpack.c.l.b16 %v564
    %v1101 = vunpack.c.h.b16 %v564
    %v1102 = vunpack.c.l.b16 %v565
    %v1103 = vunpack.c.h.b16 %v565
    %v1104 = vunpack.c.l.b16 %v566
    %v1105 = vunpack.c.h.b16 %v566
    %v1106 = vunpack.c.l.b16 %v567
    %v1107 = vunpack.c.h.b16 %v567
    %v1108 = vunpack.c.l.b16 %v568
    %v1109 = vunpack.c.h.b16 %v568
    %v1110 = vunpack.c.l.b16 %v569
    %v1111 = vunpack.c.h.b16 %v569
    %v1112 = vunpack.c.l.b16 %v570
    %v1113 = vunpack.c.h.b16 %v570
    %v1114 = vunpack.c.l.b16 %v571
    %v1115 = vunpack.c.h.b16 %v571
    %v1116 = vunpack.c.l.b16 %v572
    %v1117 = vunpack.c.h.b16 %v572
    %v1118 = vunpack.c.l.b16 %v573
    %v1119 = vunpack.c.h.b16 %v573
    %v1120 = vunpack.c.l.b16 %v574
    %v1121 = vunpack.c.h.b16 %v574
    %v1122 = vunpack.c.l.b16 %v575
    %v1123 = vunpack.c.h.b16 %v575
    %v1124 = vunpack.c.l.b16 %v576
    %v1125 = vunpack.c.h.b16 %v576
    %v1126 = vunpack.c.l.b16 %v577
    %v1127 = vunpack.c.h.b16 %v577
    %v1128 = vunpack.c.l.b16 %v578
    %v1129 = vunpack.c.h.b16 %v578
    %v1130 = vunpack.c.l.b16 %v579
    %v1131 = vunpack.c.h.b16 %v579
    %v1132 = vunpack.c.l.b16 %v580
    %v1133 = vunpack.c.h.b16 %v580
    %v1134 = vunpack.c.l.b16 %v581
    %v1135 = vunpack.c.h.b16 %v581
    %v1136 = vunpack.c.l.b16 %v582
    %v1137 = vunpack.c.h.b16 %v582
    %v1138 = vunpack.c.l.b16 %v583
    %v1139 = vunpack.c.h.b16 %v583
    %v1140 = vunpack.c.l.b16 %v584
    %v1141 = vunpack.c.h.b16 %v584
    %v1142 = vunpack.c.l.b16 %v585
    %v1143 = vunpack.c.h.b16 %v585
    %v1144 = vunpack.c.l.b16 %v586
    %v1145 = vunpack.c.h.b16 %v586
    %v1146 = vunpack.c.l.b16 %v587
    %v1147 = vunpack.c.h.b16 %v587
    %v1148 = vunpack.c.l.b16 %v588
    %v1149 = vunpack.c.h.b16 %v588
    %v1150 = vunpack.c.l.b16 %v589
    %v1151 = vunpack.c.h.b16 %v589
    %v1152 = vunpack.c.l.b16 %v590
    %v1153 = vunpack.c.h.b16 %v590
    %v1154 = vunpack.c.l.b16 %v591
    %v1155 = vunpack.c.h.b16 %v591
    %v1156 = vunpack.c.l.b16 %v592
    %v1157 = vunpack.c.h.b16 %v592
    %v1158 = vunpack.c.l.b16 %v593
    %v1159 = vunpack.c.h.b16 %v593
    %v1160 = vunpack.c.l.b16 %v594
    %v1161 = vunpack.c.h.b16 %v594
    %v1162 = vunpack.c.l.b16 %v595
    %v1163 = vunpack.c.h.b16 %v595
    %v1164 = vunpack.c.l.b16 %v596
    %v1165 = vunpack.c.h.b16 %v596
    %v1166 = vunpack.c.l.b16 %v597
    %v1167 = vunpack.c.h.b16 %v597
    %v1168 = vunpack.c.l.b16 %v598
    %v1169 = vunpack.c.h.b16 %v598
    %v1170 = vunpack.c.l.b16 %v599
    %v1171 = vunpack.c.h.b16 %v599
    %v1172 = vunpack.c.l.b16 %v600
    %v1173 = vunpack.c.h.b16 %v600
    %v1174 = vunpack.c.l.b16 %v601
    %v1175 = vunpack.c.h.b16 %v601
    %v1176 = vunpack.c.l.b16 %v602
    %v1177 = vunpack.c.h.b16 %v602
    %v1178 = vunpack.c.l.b16 %v603
    %v1179 = vunpack.c.h.b16 %v603
    %v1180 = vunpack.c.l.b16 %v604
    %v1181 = vunpack.c.h.b16 %v604
    %v1182 = vunpack.c.l.b16 %v605
    %v1183 = vunpack.c.h.b16 %v605
    %v1184 = vunpack.c.l.b16 %v606
    %v1185 = vunpack.c.h.b16 %v606
    %v1186 = vunpack.c.l.b16 %v607
    %v1187 = vunpack.c.h.b16 %v607
    %v1188 = vunpack.c.l.b16 %v608
    %v1189 = vunpack.c.h.b16 %v608
    %v1190 = vunpack.c.l.b16 %v609
    %v1191 = vunpack.c.h.b16 %v609
    %v1192 = vunpack.c.l.b16 %v610
    %v1193 = vunpack.c.h.b16 %v610
    %v1194 = vunpack.c.l.b16 %v611
    %v1195 = vunpack.c.h.b16 %v611
    %v1196 = vunpack.c.l.b16 %v612
    %v1197 = vunpack.c.h.b16 %v612
    %v1198 = vunpack.c.l.b16 %v613
    %v1199 = vunpack.c.h.b16 %v613
    %v1200 = vunpack.c.l.b16 %v614
    %v1201 = vunpack.c.h.b16 %v614
    %v1202 = vunpack.c.l.b16 %v615
    %v1203 = vunpack.c.h.b16 %v615
    %v1204 = vunpack.c.l.b16 %v616
    %v1205 = vunpack.c.h.b16 %v616
    %v1206 = vunpack.c.l.b16 %v617
    %v1207 = vunpack.c.h.b16 %v617
    %v1208 = vunpack.c.l.b16 %v618
    %v1209 = vunpack.c.h.b16 %v618
    %v1210 = vunpack.c.l.b16 %v619
    %v1211 = vunpack.c.h.b16 %v619
    %v1212 = vunpack.c.l.b16 %v620
    %v1213 = vunpack.c.h.b16 %v620
    %v1214 = vunpack.c.l.b16 %v621
    %v1215 = vunpack.c.h.b16 %v621
    %v1216 = vunpack.c.l.b16 %v622
    %v1217 = vunpack.c.h.b16 %v622
    %v1218 = vunpack.c.l.b16 %v623
    %v1219 = vunpack.c.h.b16 %v623
    %v1220 = vunpack.c.l.b16 %v624
    %v1221 = vunpack.c.h.b16 %v624
    %v1222 = vunpack.c.l.b16 %v625
    %v1223 = vunpack.c.h.b16 %v625
    %v1224 = vunpack.c.l.b16 %v626
    %v1225 = vunpack.c.h.b16 %v626
    %v1226 = vunpack.c.l.b16 %v627
    %v1227 = vunpack.c.h.b16 %v627
    %v1228 = vunpack.c.l.b16 %v628
    %v1229 = vunpack.c.h.b16 %v628
    %v1230 = vunpack.c.l.b16 %v629
    %v1231 = vunpack.c.h.b16 %v629
    %v1232 = vunpack.c.l.b16 %v630
    %v1233 = vunpack.c.h.b16 %v630
    %v1234 = vunpack.c.l.b16 %v631
    %v1235 = vunpack.c.h.b16 %v631
    %v1236 = vunpack.c.l.b16 %v632
    %v1237 = vunpack.c.h.b16 %v632
    %v1238 = vunpack.c.l.b16 %v633
    %v1239 = vunpack.c.h.b16 %v633
    %v1240 = vunpack.c.l.b16 %v634
    %v1241 = vunpack.c.h.b16 %v634
    %v1242 = vunpack.c.l.b16 %v635
    %v1243 = vunpack.c.h.b16 %v635
    %v1244 = vunpack.c.l.b16 %v636
    %v1245 = vunpack.c.h.b16 %v636
    %v1246 = vunpack.c.l.b16 %v637
    %v1247 = vunpack.c.h.b16 %v637
    %v1248 = vunpack.c.l.b16 %v638
    %v1249 = vunpack.c.h.b16 %v638
    %v1250 = vunpack.c.l.b16 %v639
    %v1251 = vunpack.c.h.b16 %v639
    %v1252 = vunpack.c.l.b16 %v640
    %v1253 = vunpack.c.h.b16 %v640
    %v1254 = vunpack.c.l.b16 %v641
    %v1255 = vunpack.c.h.b16 %v641
    %v1256 = vunpack.c.l.b16 %v642
    %v1257 = vunpack.c.h.b16 %v642
    %v1258 = vunpack.c.l.b16 %v643
    %v1259 = vunpack.c.h.b16 %v643
    %v1260 = vunpack.c.l.b16 %v644
    %v1261 = vunpack.c.h.b16 %v644
    %v1262 = vunpack.c.l.b16 %v645
    %v1263 = vunpack.c.h.b16 %v645
    %v1264 = vunpack.c.l.b16 %v646
    %v1265 = vunpack.c.h.b16 %v646
    %v1266 = vunpack.c.l.b16 %v647
    %v1267 = vunpack.c.h.b16 %v647
    %v1268 = vunpack.c.l.b16 %v648
    %v1269 = vunpack.c.h.b16 %v648
    %v1270 = vunpack.c.l.b16 %v649
    %v1271 = vunpack.c.h.b16 %v649
    %v1272 = vunpack.c.l.b16 %v650
    %v1273 = vunpack.c.h.b16 %v650
    %v1274 = vunpack.c.l.b16 %v651
    %v1275 = vunpack.c.h.b16 %v651
    %v1276 = vunpack.c.l.b16 %v652
    %v1277 = vunpack.c.h.b16 %v652
    %v1278 = vunpack.c.l.b16 %v653
    %v1279 = vunpack.c.h.b16 %v653
    %v1280 = vunpack.c.l.b16 %v654
    %v1281 = vunpack.c.h.b16 %v654
    %v1282 = vunpack.c.l.b16 %v655
    %v1283 = vunpack.c.h.b16 %v655
    %v1284 = vunpack.c.l.b16 %v656
    %v1285 = vunpack.c.h.b16 %v656
    %v1286 = vunpack.c.l.b16 %v657
    %v1287 = vunpack.c.h.b16 %v657
    %v1288 = vunpack.c.l.b16 %v658
    %v1289 = vunpack.c.h.b16 %v658
    %v1290 = vunpack.c.l.b16 %v659
    %v1291 = vunpack.c.h.b16 %v659
    %v1292 = vunpack.c.l.b16 %v660
    %v1293 = vunpack.c.h.b16 %v660
    %v1294 = vunpack.c.l.b16 %v661
    %v1295 = vunpack.c.h.b16 %v661
    %v1296 = vunpack.c.l.b16 %v662
    %v1297 = vunpack.c.h.b16 %v662
    %v1298 = vunpack.c.l.b16 %v663
    %v1299 = vunpack.c.h.b16 %v663
    %v1300 = vunpack.c.l.b16 %v664
    %v1301 = vunpack.c.h.b16 %v664
    %v1302 = vunpack.c.l.b16 %v665
    %v1303 = vunpack.c.h.b16 %v665
    %v1304 = vunpack.c.l.b16 %v666
    %v1305 = vunpack.c.h.b16 %v666
    %v1306 = vunpack.c.l.b16 %v667
    %v1307 = vunpack.c.h.b16 %v667
    %v1308 = vunpack.c.l.b16 %v668
    %v1309 = vunpack.c.h.b16 %v668
    %v1310 = vunpack.c.l.b16 %v669
    %v1311 = vunpack.c.h.b16 %v669
    %v1312 = vunpack.c.l.b16 %v670
    %v1313 = vunpack.c.h.b16 %v670
    %v1314 = vunpack.c.l.b16 %v671
    %v1315 = vunpack.c.h.b16 %v671
    %v1316 = vunpack.c.l.b16 %v672
    %v1317 = vunpack.c.h.b16 %v672
    %v1318 = vunpack.c.l.b16 %v673
    %v1319 = vunpack.c.h.b16 %v673
    %v1320 = vunpack.c.l.b16 %v674
    %v1321 = vunpack.c.h.b16 %v674
    %v1322 = vunpack.c.l.b16 %v675
    %v1323 = vunpack.c.h.b16 %v675
    %v1324 = vunpack.c.l.b16 %v676
    %v1325 = vunpack.c.h.b16 %v676
    %v1326 = vunpack.c.l.b16 %v677
    %v1327 = vunpack.c.h.b16 %v677
    %v1328 = vunpack.c.l.b16 %v678
    %v1329 = vunpack.c.h.b16 %v678
    %v1330 = vunpack.c.l.b16 %v679
    %v1331 = vunpack.c.h.b16 %v679
    %v1332 = vunpack.c.l.b16 %v680
    %v1333 = vunpack.c.h.b16 %v680
    %v1334 = vunpack.c.l.b16 %v681
    %v1335 = vunpack.c.h.b16 %v681
    %v1336 = vunpack.c.l.b16 %v682
    %v1337 = vunpack.c.h.b16 %v682
    %v1338 = vunpack.c.l.b16 %v683
    %v1339 = vunpack.c.h.b16 %v683
    %v1340 = vunpack.c.l.b16 %v684
    %v1341 = vunpack.c.h.b16 %v684
    %v1342 = vunpack.c.l.b16 %v685
    %v1343 = vunpack.c.h.b16 %v685
    %v1344 = vunpack.c.l.b16 %v686
    %v1345 = vunpack.c.h.b16 %v686
    %v1346 = vunpack.c.l.b16 %v687
    %v1347 = vunpack.c.h.b16 %v687
    %v1348 = vunpack.c.l.b16 %v688
    %v1349 = vunpack.c.h.b16 %v688
    %v1350 = vunpack.c.l.b16 %v689
    %v1351 = vunpack.c.h.b16 %v689
    %v1352 = vunpack.c.l.b16 %v690
    %v1353 = vunpack.c.h.b16 %v690
    %v1354 = vunpack.c.l.b16 %v691
    %v1355 = vunpack.c.h.b16 %v691
    %v1356 = vunpack.c.l.b16 %v692
    %v1357 = vunpack.c.h.b16 %v692
    %v1358 = vunpack.c.l.b16 %v693
    %v1359 = vunpack.c.h.b16 %v693
    %v1360 = vunpack.c.l.b16 %v694
    %v1361 = vunpack.c.h.b16 %v694
    %v1362 = vunpack.c.l.b16 %v695
    %v1363 = vunpack.c.h.b16 %v695
    %v1364 = vunpack.c.l.b16 %v696
    %v1365 = vunpack.c.h.b16 %v696
    %v1366 = vunpack.c.l.b16 %v697
    %v1367 = vunpack.c.h.b16 %v697
    %v1368 = vunpack.c.l.b16 %v698
    %v1369 = vunpack.c.h.b16 %v698
    %v1370 = vunpack.c.l.b16 %v699
    %v1371 = vunpack.c.h.b16 %v699
    %v1372 = vunpack.c.l.b16 %v700
    %v1373 = vunpack.c.h.b16 %v700
    %v1374 = vunpack.c.l.b16 %v701
    %v1375 = vunpack.c.h.b16 %v701
    %v1376 = vunpack.c.l.b16 %v702
    %v1377 = vunpack.c.h.b16 %v702
    %v1378 = vunpack.c.l.b16 %v703
    %v1379 = vunpack.c.h.b16 %v703
    %v1380 = vunpack.c.l.b16 %v704
    %v1381 = vunpack.c.h.b16 %v704
    %v1382 = vunpack.c.l.b16 %v705
    %v1383 = vunpack.c.h.b16 %v705
    %v1384 = vunpack.c.l.b16 %v706
    %v1385 = vunpack.c.h.b16 %v706
    %v1386 = vunpack.c.l.b16 %v707
    %v1387 = vunpack.c.h.b16 %v707
    %v1388 = vunpack.c.l.b16 %v708
    %v1389 = vunpack.c.h.b16 %v708
    %v1390 = vunpack.c.l.b16 %v709
    %v1391 = vunpack.c.h.b16 %v709
    %v1392 = vunpack.c.l.b16 %v710
    %v1393 = vunpack.c.h.b16 %v710
    %v1394 = vunpack.c.l.b16 %v711
    %v1395 = vunpack.c.h.b16 %v711
    %v1396 = vunpack.c.l.b16 %v712
    %v1397 = vunpack.c.h.b16 %v712
    %v1398 = vunpack.c.l.b16 %v713
    %v1399 = vunpack.c.h.b16 %v713
    %v1400 = vunpack.c.l.b16 %v714
    %v1401 = vunpack.c.h.b16 %v714
    %v1402 = vunpack.c.l.b16 %v715
    %v1403 = vunpack.c.h.b16 %v715
    %v1404 = vunpack.c.l.b16 %v716
    %v1405 = vunpack.c.h.b16 %v716
    %v1406 = vunpack.c.l.b16 %v717
    %v1407 = vunpack.c.h.b16 %v717
    %v1408 = vunpack.c.l.b16 %v718
    %v1409 = vunpack.c.h.b16 %v718
    %v1410 = vunpack.c.l.b16 %v719
    %v1411 = vunpack.c.h.b16 %v719
    %v1412 = vunpack.c.l.b16 %v720
    %v1413 = vunpack.c.h.b16 %v720
    %v1414 = vunpack.c.l.b16 %v721
    %v1415 = vunpack.c.h.b16 %v721
    %v1416 = vunpack.c.l.b16 %v722
    %v1417 = vunpack.c.h.b16 %v722
    %v1418 = vunpack.c.l.b16 %v723
    %v1419 = vunpack.c.h.b16 %v723
    %v1420 = vunpack.c.l.b16 %v724
    %v1421 = vunpack.c.h.b16 %v724
    %v1422 = vunpack.c.l.b16 %v725
    %v1423 = vunpack.c.h.b16 %v725
    %v1424 = vunpack.c.l.b16 %v726
    %v1425 = vunpack.c.h.b16 %v726
    %v1426 = vunpack.c.l.b16 %v727
    %v1427 = vunpack.c.h.b16 %v727
    %v1428 = vunpack.c.l.b16 %v728
    %v1429 = vunpack.c.h.b16 %v728
    %v1430 = vunpack.c.l.b16 %v729
    %v1431 = vunpack.c.h.b16 %v729
    %v1432 = vunpack.c.l.b16 %v730
    %v1433 = vunpack.c.h.b16 %v730
    %v1434 = vunpack.c.l.b16 %v731
    %v1435 = vunpack.c.h.b16 %v731
    %v1436 = vunpack.c.l.b16 %v732
    %v1437 = vunpack.c.h.b16 %v732
    %v1438 = vunpack.c.l.b16 %v733
    %v1439 = vunpack.c.h.b16 %v733
    %v1440 = vunpack.c.l.b16 %v734
    %v1441 = vunpack.c.h.b16 %v734
    %v1442 = vunpack.c.l.b16 %v735
    %v1443 = vunpack.c.h.b16 %v735
    %v1444 = vunpack.c.l.b16 %v736
    %v1445 = vunpack.c.h.b16 %v736
    %v1446 = vunpack.c.l.b16 %v737
    %v1447 = vunpack.c.h.b16 %v737
    %v1448 = vunpack.c.l.b16 %v738
    %v1449 = vunpack.c.h.b16 %v738
    %v1450 = vunpack.c.l.b16 %v739
    %v1451 = vunpack.c.h.b16 %v739
    %v1452 = vunpack.c.l.b16 %v740
    %v1453 = vunpack.c.h.b16 %v740
    %v1454 = vunpack.c.l.b16 %v741
    %v1455 = vunpack.c.h.b16 %v741
    %v1456 = vunpack.c.l.b16 %v742
    %v1457 = vunpack.c.h.b16 %v742
    %v1458 = vunpack.c.l.b16 %v743
    %v1459 = vunpack.c.h.b16 %v743
    %v1460 = vunpack.c.l.b16 %v744
    %v1461 = vunpack.c.h.b16 %v744
    %v1462 = vunpack.c.l.b16 %v745
    %v1463 = vunpack.c.h.b16 %v745
    %v1464 = vunpack.c.l.b16 %v746
    %v1465 = vunpack.c.h.b16 %v746
    %v1466 = vunpack.c.l.b16 %v747
    %v1467 = vunpack.c.h.b16 %v747
    %v1468 = vunpack.c.l.b16 %v748
    %v1469 = vunpack.c.h.b16 %v748
    %v1470 = vunpack.c.l.b16 %v749
    %v1471 = vunpack.c.h.b16 %v749
    %v1472 = vunpack.c.l.b16 %v750
    %v1473 = vunpack.c.h.b16 %v750
    %v1474 = vunpack.c.l.b16 %v751
    %v1475 = vunpack.c.h.b16 %v751
    %v1476 = vunpack.c.l.b16 %v752
    %v1477 = vunpack.c.h.b16 %v752
    %v1478 = vunpack.c.l.b16 %v753
    %v1479 = vunpack.c.h.b16 %v753
    %v1480 = vunpack.c.l.b16 %v754
    %v1481 = vunpack.c.h.b16 %v754
    %v1482 = vunpack.c.l.b16 %v755
    %v1483 = vunpack.c.h.b16 %v755
    %v1484 = vunpack.c.l.b16 %v756
    %v1485 = vunpack.c.h.b16 %v756
    %v1486 = vunpack.c.l.b16 %v757
    %v1487 = vunpack.c.h.b16 %v757
    %v1488 = vunpack.c.l.b16 %v758
    %v1489 = vunpack.c.h.b16 %v758
    %v1490 = vunpack.c.l.b16 %v759
    %v1491 = vunpack.c.h.b16 %v759
    %v1492 = vunpack.c.l.b16 %v760
    %v1493 = vunpack.c.h.b16 %v760
    %v1494 = vunpack.c.l.b16 %v761
    %v1495 = vunpack.c.h.b16 %v761
    %v1496 = vunpack.c.l.b16 %v762
    %v1497 = vunpack.c.h.b16 %v762
    %v1498 = vunpack.c.l.b16 %v763
    %v1499 = vunpack.c.h.b16 %v763
    %v1500 = vunpack.c.l.b16 %v764
    %v1501 = vunpack.c.h.b16 %v764
    %v1502 = vunpack.c.l.b16 %v765
    %v1503 = vunpack.c.h.b16 %v765
    %v1504 = vunpack.c.l.b16 %v766
    %v1505 = vunpack.c.h.b16 %v766
    %v1506 = vunpack.c.l.b16 %v767
    %v1507 = vunpack.c.h.b16 %v767
    %v1508 = vunpack.c.l.b16 %v768
    %v1509 = vunpack.c.h.b16 %v768
    %v1510 = vunpack.c.l.b16 %v769
    %v1511 = vunpack.c.h.b16 %v769
    %v1512 = vunpack.c.l.b16 %v770
    %v1513 = vunpack.c.h.b16 %v770
    %v1514 = vunpack.c.l.b16 %v771
    %v1515 = vunpack.c.h.b16 %v771
    %v1516 = vunpack.c.l.b16 %v772
    %v1517 = vunpack.c.h.b16 %v772
    %v1518 = vunpack.c.l.b16 %v773
    %v1519 = vunpack.c.h.b16 %v773
    %v1520 = vunpack.c.l.b16 %v774
    %v1521 = vunpack.c.h.b16 %v774
    %v1522 = vunpack.c.l.b16 %v775
    %v1523 = vunpack.c.h.b16 %v775
    %v1524 = vunpack.c.l.b16 %v776
    %v1525 = vunpack.c.h.b16 %v776
    %v1526 = vunpack.c.l.b16 %v777
    %v1527 = vunpack.c.h.b16 %v777
    %v1528 = vunpack.c.l.b16 %v778
    %v1529 = vunpack.c.h.b16 %v778
    %v1530 = vunpack.c.l.b16 %v779
    %v1531 = vunpack.c.h.b16 %v779
    %v1532 = vunpack.c.l.b16 %v780
    %v1533 = vunpack.c.h.b16 %v780
    %v1534 = vunpack.c.l.b16 %v781
    %v1535 = vunpack.c.h.b16 %v781
    %v1536 = vunpack.c.l.b16 %v782
    %v1537 = vunpack.c.h.b16 %v782
    %v1538 = vunpack.c.l.b16 %v783
    %v1539 = vunpack.c.h.b16 %v783
    %v1540 = vunpack.c.l.b16 %v784
    %v1541 = vunpack.c.h.b16 %v784
    %v1542 = vunpack.c.l.b16 %v785
    %v1543 = vunpack.c.h.b16 %v785
    %v1544 = vunpack.c.l.b16 %v786
    %v1545 = vunpack.c.h.b16 %v786
    %v1546 = vunpack.c.l.b16 %v787
    %v1547 = vunpack.c.h.b16 %v787
    %v1548 = vunpack.c.l.b16 %v788
    %v1549 = vunpack.c.h.b16 %v788
    %v1550 = vunpack.c.l.b16 %v789
    %v1551 = vunpack.c.h.b16 %v789
    %v1552 = vunpack.c.l.b16 %v790
    %v1553 = vunpack.c.h.b16 %v790
    %v1554 = vunpack.c.l.b16 %v791
    %v1555 = vunpack.c.h.b16 %v791
    %v1556 = vunpack.c.l.b16 %v792
    %v1557 = vunpack.c.h.b16 %v792
    %v1558 = vunpack.c.l.b16 %v793
    %v1559 = vunpack.c.h.b16 %v793
    %v1560 = vunpack.c.l.b16 %v794
    %v1561 = vunpack.c.h.b16 %v794
    %v1562 = vunpack.c.l.b16 %v795
    %v1563 = vunpack.c.h.b16 %v795
    %v1564 = vunpack.c.l.b16 %v796
    %v1565 = vunpack.c.h.b16 %v796
    %v1566 = vunpack.c.l.b16 %v797
    %v1567 = vunpack.c.h.b16 %v797
    %v1568 = vunpack.c.l.b16 %v798
    %v1569 = vunpack.c.h.b16 %v798
    %v1570 = vunpack.c.l.b16 %v799
    %v1571 = vunpack.c.h.b16 %v799
    %v1572 = vunpack.c.l.b16 %v800
    %v1573 = vunpack.c.h.b16 %v800
    %v1574 = vunpack.c.l.b16 %v801
    %v1575 = vunpack.c.h.b16 %v801
    %v1576 = vunpack.c.l.b16 %v802
    %v1577 = vunpack.c.h.b16 %v802
    %v1578 = vunpack.c.l.b16 %v803
    %v1579 = vunpack.c.h.b16 %v803
    %v1580 = vunpack.c.l.b16 %v804
    %v1581 = vunpack.c.h.b16 %v804
    %v1582 = vunpack.c.l.b16 %v805
    %v1583 = vunpack.c.h.b16 %v805
    %v1584 = vpack.c.b16 %v1076, %v1072
    %v1585 = vpack.c.b16 %v1077, %v1073
    %v1586 = vpack.c.b16 %v1078, %v1074
    %v1587 = vpack.c.b16 %v1079, %v1075
    %v1588 = vpack.c.b16 %v1084, %v1080
    %v1589 = vpack.c.b16 %v1085, %v1081
    %v1590 = vpack.c.b16 %v1086, %v1082
    %v1591 = vpack.c.b16 %v1087, %v1083
    %v1592 = vpack.c.b16 %v1092, %v1088
    %v1593 = vpack.c.b16 %v1093, %v1089
    %v1594 = vpack.c.b16 %v1094, %v1090
    %v1595 = vpack.c.b16 %v1095, %v1091
    %v1596 = vpack.c.b16 %v1100, %v1096
    %v1597 = vpack.c.b16 %v1101, %v1097
    %v1598 = vpack.c.b16 %v1102, %v1098
    %v1599 = vpack.c.b16 %v1103, %v1099
    %v1600 = vpack.c.b16 %v1108, %v1104
    %v1601 = vpack.c.b16 %v1109, %v1105
    %v1602 = vpack.c.b16 %v1110, %v1106
    %v1603 = vpack.c.b16 %v1111, %v1107
    %v1604 = vpack.c.b16 %v1116, %v1112
    %v1605 = vpack.c.b16 %v1117, %v1113
    %v1606 = vpack.c.b16 %v1118, %v1114
    %v1607 = vpack.c.b16 %v1119, %v1115
    %v1608 = vpack.c.b16 %v1124, %v1120
    %v1609 = vpack.c.b16 %v1125, %v1121
    %v1610 = vpack.c.b16 %v1126, %v1122
    %v1611 = vpack.c.b16 %v1127, %v1123
    %v1612 = vpack.c.b16 %v1132, %v1128
    %v1613 = vpack.c.b16 %v1133, %v1129
    %v1614 = vpack.c.b16 %v1134, %v1130
    %v1615 = vpack.c.b16 %v1135, %v1131
    %v1616 = vpack.c.b16 %v1140, %v1136
    %v1617 = vpack.c.b16 %v1141, %v1137
    %v1618 = vpack.c.b16 %v1142, %v1138
    %v1619 = vpack.c.b16 %v1143, %v1139
    %v1620 = vpack.c.b16 %v1148, %v1144
    %v1621 = vpack.c.b16 %v1149, %v1145
    %v1622 = vpack.c.b16 %v1150, %v1146
    %v1623 = vpack.c.b16 %v1151, %v1147
    %v1624 = vpack.c.b16 %v1156, %v1152
    %v1625 = vpack.c.b16 %v1157, %v1153
    %v1626 = vpack.c.b16 %v1158, %v1154
    %v1627 = vpack.c.b16 %v1159, %v1155
    %v1628 = vpack.c.b16 %v1164, %v1160
    %v1629 = vpack.c.b16 %v1165, %v1161
    %v1630 = vpack.c.b16 %v1166, %v1162
    %v1631 = vpack.c.b16 %v1167, %v1163
    %v1632 = vpack.c.b16 %v1172, %v1168
    %v1633 = vpack.c.b16 %v1173, %v1169
    %v1634 = vpack.c.b16 %v1174, %v1170
    %v1635 = vpack.c.b16 %v1175, %v1171
    %v1636 = vpack.c.b16 %v1180, %v1176
    %v1637 = vpack.c.b16 %v1181, %v1177
    %v1638 = vpack.c.b16 %v1182, %v1178
    %v1639 = vpack.c.b16 %v1183, %v1179
    %v1640 = vpack.c.b16 %v1188, %v1184
    %v1641 = vpack.c.b16 %v1189, %v1185
    %v1642 = vpack.c.b16 %v1190, %v1186
    %v1643 = vpack.c.b16 %v1191, %v1187
    %v1644 = vpack.c.b16 %v1196, %v1192
    %v1645 = vpack.c.b16 %v1197, %v1193
    %v1646 = vpack.c.b16 %v1198, %v1194
    %v1647 = vpack.c.b16 %v1199, %v1195
    %v1648 = vpack.c.b16 %v1204, %v1200
    %v1649 = vpack.c.b16 %v1205, %v1201
    %v1650 = vpack.c.b16 %v1206, %v1202
    %v1651 = vpack.c.b16 %v1207, %v1203
    %v1652 = vpack.c.b16 %v1212, %v1208
    %v1653 = vpack.c.b16 %v1213, %v1209
    %v1654 = vpack.c.b16 %v1214, %v1210
    %v1655 = vpack.c.b16 %v1215, %v1211
    %v1656 = vpack.c.b16 %v1220, %v1216
    %v1657 = vpack.c.b16 %v1221, %v1217
    %v1658 = vpack.c.b16 %v1222, %v1218
    %v1659 = vpack.c.b16 %v1223, %v1219
    %v1660 = vpack.c.b16 %v1228, %v1224
    %v1661 = vpack.c.b16 %v1229, %v1225
    %v1662 = vpack.c.b16 %v1230, %v1226
    %v1663 = vpack.c.b16 %v1231, %v1227
    %v1664 = vpack.c.b16 %v1236, %v1232
    %v1665 = vpack.c.b16 %v1237, %v1233
    %v1666 = vpack.c.b16 %v1238, %v1234
    %v1667 = vpack.c.b16 %v1239, %v1235
    %v1668 = vpack.c.b16 %v1244, %v1240
    %v1669 = vpack.c.b16 %v1245, %v1241
    %v1670 = vpack.c.b16 %v1246, %v1242
    %v1671 = vpack.c.b16 %v1247, %v1243
    %v1672 = vpack.c.b16 %v1252, %v1248
    %v1673 = vpack.c.b16 %v1253, %v1249
    %v1674 = vpack.c.b16 %v1254, %v1250
    %v1675 = vpack.c.b16 %v1255, %v1251
    %v1676 = vpack.c.b16 %v1260, %v1256
    %v1677 = vpack.c.b16 %v1261, %v1257
    %v1678 = vpack.c.b16 %v1262, %v1258
    %v1679 = vpack.c.b16 %v1263, %v1259
    %v1680 = vpack.c.b16 %v1268, %v1264
    %v1681 = vpack.c.b16 %v1269, %v1265
    %v1682 = vpack.c.b16 %v1270, %v1266
    %v1683 = vpack.c.b16 %v1271, %v1267
    %v1684 = vpack.c.b16 %v1276, %v1272
    %v1685 = vpack.c.b16 %v1277, %v1273
    %v1686 = vpack.c.b16 %v1278, %v1274
    %v1687 = vpack.c.b16 %v1279, %v1275
    %v1688 = vpack.c.b16 %v1284, %v1280
    %v1689 = vpack.c.b16 %v1285, %v1281
    %v1690 = vpack.c.b16 %v1286, %v1282
    %v1691 = vpack.c.b16 %v1287, %v1283
    %v1692 = vpack.c.b16 %v1292, %v1288
    %v1693 = vpack.c.b16 %v1293, %v1289
    %v1694 = vpack.c.b16 %v1294, %v1290
    %v1695 = vpack.c.b16 %v1295, %v1291
    %v1696 = vpack.c.b16 %v1300, %v1296
    %v1697 = vpack.c.b16 %v1301, %v1297
    %v1698 = vpack.c.b16 %v1302, %v1298
    %v1699 = vpack.c.b16 %v1303, %v1299
    %v1700 = vpack.c.b16 %v1308, %v1304
    %v1701 = vpack.c.b16 %v1309, %v1305
    %v1702 = vpack.c.b16 %v1310, %v1306
    %v1703 = vpack.c.b16 %v1311, %v1307
    %v1704 = vpack.c.b16 %v1316, %v1312
    %v1705 = vpack.c.b16 %v1317, %v1313
    %v1706 = vpack.c.b16 %v1318, %v1314
    %v1707 = vpack.c.b16 %v1319, %v1315
    %v1708 = vpack.c.b16 %v1324, %v1320
    %v1709 = vpack.c.b16 %v1325, %v1321
    %v1710 = vpack.c.b16 %v1326, %v1322
    %v1711 = vpack.c.b16 %v1327, %v1323
    %v1712 = vpack.c.b16 %v1332, %v1328
    %v1713 = vpack.c.b16 %v1333, %v1329
    %v1714 = vpack.c.b16 %v1334, %v1330
    %v1715 = vpack.c.b16 %v1335, %v1331
    %v1716 = vpack.c.b16 %v1340, %v1336
    %v1717 = vpack.c.b16 %v1341, %v1337
    %v1718 = vpack.c.b16 %v1342, %v1338
    %v1719 = vpack.c.b16 %v1343, %v1339
    %v1720 = vpack.c.b16 %v1348, %v1344
    %v1721 = vpack.c.b16 %v1349, %v1345
    %v1722 = vpack.c.b16 %v1350, %v1346
    %v1723 = vpack.c.b16 %v1351, %v1347
    %v1724 = vpack.c.b16 %v1356, %v1352
    %v1725 = vpack.c.b16 %v1357, %v1353
    %v1726 = vpack.c.b16 %v1358, %v1354
    %v1727 = vpack.c.b16 %v1359, %v1355
    %v1728 = vpack.c.b16 %v1364, %v1360
    %v1729 = vpack.c.b16 %v1365, %v1361
    %v1730 = vpack.c.b16 %v1366, %v1362
    %v1731 = vpack.c.b16 %v1367, %v1363
    %v1732 = vpack.c.b16 %v1372, %v1368
    %v1733 = vpack.c.b16 %v1373, %v1369
    %v1734 = vpack.c.b16 %v1374, %v1370
    %v1735 = vpack.c.b16 %v1375, %v1371
    %v1736 = vpack.c.b16 %v1380, %v1376
    %v1737 = vpack.c.b16 %v1381, %v1377
    %v1738 = vpack.c.b16 %v1382, %v1378
    %v1739 = vpack.c.b16 %v1383, %v1379
    %v1740 = vpack.c.b16 %v1388, %v1384
    %v1741 = vpack.c.b16 %v1389, %v1385
    %v1742 = vpack.c.b16 %v1390, %v1386
    %v1743 = vpack.c.b16 %v1391, %v1387
    %v1744 = vpack.c.b16 %v1396, %v1392
    %v1745 = vpack.c.b16 %v1397, %v1393
    %v1746 = vpack.c.b16 %v1398, %v1394
    %v1747 = vpack.c.b16 %v1399, %v1395
    %v1748 = vpack.c.b16 %v1404, %v1400
    %v1749 = vpack.c.b16 %v1405, %v1401
    %v1750 = vpack.c.b16 %v1406, %v1402
    %v1751 = vpack.c.b16 %v1407, %v1403
    %v1752 = vpack.c.b16 %v1412, %v1408
    %v1753 = vpack.c.b16 %v1413, %v1409
    %v1754 = vpack.c.b16 %v1414, %v1410
    %v1755 = vpack.c.b16 %v1415, %v1411
    %v1756 = vpack.c.b16 %v1420, %v1416
    %v1757 = vpack.c.b16 %v1421, %v1417
    %v1758 = vpack.c.b16 %v1422, %v1418
    %v1759 = vpack.c.b16 %v1423, %v1419
    %v1760 = vpack.c.b16 %v1428, %v1424
    %v1761 = vpack.c.b16 %v1429, %v1425
    %v1762 = vpack.c.b16 %v1430, %v1426
    %v1763 = vpack.c.b16 %v1431, %v1427
    %v1764 = vpack.c.b16 %v1436, %v1432
    %v1765 = vpack.c.b16 %v1437, %v1433
    %v1766 = vpack.c.b16 %v1438, %v1434
    %v1767 = vpack.c.b16 %v1439, %v1435
    %v1768 = vpack.c.b16 %v1444, %v1440
    %v1769 = vpack.c.b16 %v1445, %v1441
    %v1770 = vpack.c.b16 %v1446, %v1442
    %v1771 = vpack.c.b16 %v1447, %v1443
    %v1772 = vpack.c.b16 %v1452, %v1448
    %v1773 = vpack.c.b16 %v1453, %v1449
    %v1774 = vpack.c.b16 %v1454, %v1450
    %v1775 = vpack.c.b16 %v1455, %v1451
    %v1776 = vpack.c.b16 %v1460, %v1456
    %v1777 = vpack.c.b16 %v1461, %v1457
    %v1778 = vpack.c.b16 %v1462, %v1458
    %v1779 = vpack.c.b16 %v1463, %v1459
    %v1780 = vpack.c.b16 %v1468, %v1464
    %v1781 = vpack.c.b16 %v1469, %v1465
    %v1782 = vpack.c.b16 %v1470, %v1466
    %v1783 = vpack.c.b16 %v1471, %v1467
    %v1784 = vpack.c.b16 %v1476, %v1472
    %v1785 = vpack.c.b16 %v1477, %v1473
    %v1786 = vpack.c.b16 %v1478, %v1474
    %v1787 = vpack.c.b16 %v1479, %v1475
    %v1788 = vpack.c.b16 %v1484, %v1480
    %v1789 = vpack.c.b16 %v1485, %v1481
    %v1790 = vpack.c.b16 %v1486, %v1482
    %v1791 = vpack.c.b16 %v1487, %v1483
    %v1792 = vpack.c.b16 %v1492, %v1488
    %v1793 = vpack.c.b16 %v1493, %v1489
    %v1794 = vpack.c.b16 %v1494, %v1490
    %v1795 = vpack.c.b16 %v1495, %v1491
    %v1796 = vpack.c.b16 %v1500, %v1496
    %v1797 = vpack.c.b16 %v1501, %v1497
    %v1798 = vpack.c.b16 %v1502, %v1498
    %v1799 = vpack.c.b16 %v1503, %v1499
    %v1800 = vpack.c.b16 %v1508, %v1504
    %v1801 = vpack.c.b16 %v1509, %v1505
    %v1802 = vpack.c.b16 %v1510, %v1506
    %v1803 = vpack.c.b16 %v1511, %v1507
    %v1804 = vpack.c.b16 %v1516, %v1512
    %v1805 = vpack.c.b16 %v1517, %v1513
    %v1806 = vpack.c.b16 %v1518, %v1514
    %v1807 = vpack.c.b16 %v1519, %v1515
    %v1808 = vpack.c.b16 %v1524, %v1520
    %v1809 = vpack.c.b16 %v1525, %v1521
    %v1810 = vpack.c.b16 %v1526, %v1522
    %v1811 = vpack.c.b16 %v1527, %v1523
    %v1812 = vpack.c.b16 %v1532, %v1528
    %v1813 = vpack.c.b16 %v1533, %v1529
    %v1814 = vpack.c.b16 %v1534, %v1530
    %v1815 = vpack.c.b16 %v1535, %v1531
    %v1816 = vpack.c.b16 %v1540, %v1536
    %v1817 = vpack.c.b16 %v1541, %v1537
    %v1818 = vpack.c.b16 %v1542, %v1538
    %v1819 = vpack.c.b16 %v1543, %v1539
    %v1820 = vpack.c.b16 %v1548, %v1544
    %v1821 = vpack.c.b16 %v1549, %v1545
    %v1822 = vpack.c.b16 %v1550, %v1546
    %v1823 = vpack.c.b16 %v1551, %v1547
    %v1824 = vpack.c.b16 %v1556, %v1552
    %v1825 = vpack.c.b16 %v1557, %v1553
    %v1826 = vpack.c.b16 %v1558, %v1554
    %v1827 = vpack.c.b16 %v1559, %v1555
    %v1828 = vpack.c.b16 %v1564, %v1560
    %v1829 = vpack.c.b16 %v1565, %v1561
    %v1830 = vpack.c.b16 %v1566, %v1562
    %v1831 = vpack.c.b16 %v1567, %v1563
    %v1832 = vpack.c.b16 %v1572, %v1568
    %v1833 = vpack.c.b16 %v1573, %v1569
    %v1834 = vpack.c.b16 %v1574, %v1570
    %v1835 = vpack.c.b16 %v1575, %v1571
    %v1836 = vpack.c.b16 %v1580, %v1576
    %v1837 = vpack.c.b16 %v1581, %v1577
    %v1838 = vpack.c.b16 %v1582, %v1578
    %v1839 = vpack.c.b16 %v1583, %v1579
    %2096 = vmatpush.bf16.msra.mxu0 %v1612
    %2097 = vmatpush.bf16.msra.mxu0 %v1608
    %2098 = vmatpush.bf16.msra.mxu0 %v1604
    %2099 = vmatpush.bf16.msra.mxu0 %v1600
    %2100 = vmatpush.bf16.msra.mxu0 %v1596
    %2101 = vmatpush.bf16.msra.mxu0 %v1592
    %2102 = vmatpush.bf16.msra.mxu0 %v1588
    %2103 = vmatpush.bf16.msra.mxu0 %v1584
    %2104 = vmatmul.bf16.gmra.mxu0 %v542
    %v2105 = vpop.f32.mrf.mxu0
    %v2106 = vadd.f32 %v808, %v2105
    %v2107 = vpop.f32.mrf.mxu0
    %2108 = vdwg.mxu0
    %2109 = vmatpush.bf16.msra.mxu0 %v1644
    %2110 = vmatpush.bf16.msra.mxu0 %v1640
    %2111 = vmatpush.bf16.msra.mxu0 %v1636
    %2112 = vmatpush.bf16.msra.mxu0 %v1632
    %2113 = vmatpush.bf16.msra.mxu0 %v1628
    %2114 = vmatpush.bf16.msra.mxu0 %v1624
    %2115 = vmatpush.bf16.msra.mxu0 %v1620
    %2116 = vmatpush.bf16.msra.mxu0 %v1616
    %2117 = vmatmul.bf16.gmra.mxu0 %v543
    %v2118 = vpop.f32.mrf.mxu0
    %v2119 = vadd.f32 %v2106, %v2118
    %v2120 = vpop.f32.mrf.mxu0
    %2121 = vdwg.mxu0
    %2122 = vmatpush.bf16.msra.mxu0 %v1676
    %2123 = vmatpush.bf16.msra.mxu0 %v1672
    %2124 = vmatpush.bf16.msra.mxu0 %v1668
    %2125 = vmatpush.bf16.msra.mxu0 %v1664
    %2126 = vmatpush.bf16.msra.mxu0 %v1660
    %2127 = vmatpush.bf16.msra.mxu0 %v1656
    %2128 = vmatpush.bf16.msra.mxu0 %v1652
    %2129 = vmatpush.bf16.msra.mxu0 %v1648
    %2130 = vmatmul.bf16.gmra.mxu0 %v544
    %v2131 = vpop.f32.mrf.mxu0
    %v2132 = vadd.f32 %v2119, %v2131
    %v2133 = vpop.f32.mrf.mxu0
    %2134 = vdwg.mxu0
    %2135 = vmatpush.bf16.msra.mxu0 %v1708
    %2136 = vmatpush.bf16.msra.mxu0 %v1704
    %2137 = vmatpush.bf16.msra.mxu0 %v1700
    %2138 = vmatpush.bf16.msra.mxu0 %v1696
    %2139 = vmatpush.bf16.msra.mxu0 %v1692
    %2140 = vmatpush.bf16.msra.mxu0 %v1688
    %2141 = vmatpush.bf16.msra.mxu0 %v1684
    %2142 = vmatpush.bf16.msra.mxu0 %v1680
    %2143 = vmatmul.bf16.gmra.mxu0 %v545
    %v2144 = vpop.f32.mrf.mxu0
    %v2145 = vadd.f32 %v2132, %v2144
    %v2146 = vpop.f32.mrf.mxu0
    %2147 = vdwg.mxu0
    %2148 = vmatpush.bf16.msra.mxu0 %v1740
    %2149 = vmatpush.bf16.msra.mxu0 %v1736
    %2150 = vmatpush.bf16.msra.mxu0 %v1732
    %2151 = vmatpush.bf16.msra.mxu0 %v1728
    %2152 = vmatpush.bf16.msra.mxu0 %v1724
    %2153 = vmatpush.bf16.msra.mxu0 %v1720
    %2154 = vmatpush.bf16.msra.mxu0 %v1716
    %2155 = vmatpush.bf16.msra.mxu0 %v1712
    %2156 = vmatmul.bf16.gmra.mxu0 %v546
    %v2157 = vpop.f32.mrf.mxu0
    %v2158 = vadd.f32 %v2145, %v2157
    %v2159 = vpop.f32.mrf.mxu0
    %2160 = vdwg.mxu0
    %2161 = vmatpush.bf16.msra.mxu0 %v1772
    %2162 = vmatpush.bf16.msra.mxu0 %v1768
    %2163 = vmatpush.bf16.msra.mxu0 %v1764
    %2164 = vmatpush.bf16.msra.mxu0 %v1760
    %2165 = vmatpush.bf16.msra.mxu0 %v1756
    %2166 = vmatpush.bf16.msra.mxu0 %v1752
    %2167 = vmatpush.bf16.msra.mxu0 %v1748
    %2168 = vmatpush.bf16.msra.mxu0 %v1744
    %2169 = vmatmul.bf16.gmra.mxu0 %v547
    %v2170 = vpop.f32.mrf.mxu0
    %v2171 = vadd.f32 %v2158, %v2170
    %v2172 = vpop.f32.mrf.mxu0
    %2173 = vdwg.mxu0
    %2174 = vmatpush.bf16.msra.mxu0 %v1804
    %2175 = vmatpush.bf16.msra.mxu0 %v1800
    %2176 = vmatpush.bf16.msra.mxu0 %v1796
    %2177 = vmatpush.bf16.msra.mxu0 %v1792
    %2178 = vmatpush.bf16.msra.mxu0 %v1788
    %2179 = vmatpush.bf16.msra.mxu0 %v1784
    %2180 = vmatpush.bf16.msra.mxu0 %v1780
    %2181 = vmatpush.bf16.msra.mxu0 %v1776
    %2182 = vmatmul.bf16.gmra.mxu0 %v548
    %v2183 = vpop.f32.mrf.mxu0
    %v2184 = vadd.f32 %v2171, %v2183
    %v2185 = vpop.f32.mrf.mxu0
    %2186 = vdwg.mxu0
    %2187 = vmatpush.bf16.msra.mxu0 %v1836
    %2188 = vmatpush.bf16.msra.mxu0 %v1832
    %2189 = vmatpush.bf16.msra.mxu0 %v1828
    %2190 = vmatpush.bf16.msra.mxu0 %v1824
    %2191 = vmatpush.bf16.msra.mxu0 %v1820
    %2192 = vmatpush.bf16.msra.mxu0 %v1816
    %2193 = vmatpush.bf16.msra.mxu0 %v1812
    %2194 = vmatpush.bf16.msra.mxu0 %v1808
    %2195 = vmatmul.bf16.gmra.mxu0 %v549
    %v2196 = vpop.f32.mrf.mxu0
    %v2197 = vadd.f32 %v2184, %v2196
    %v2198 = vpop.f32.mrf.mxu0
    %2199 = vdwg.mxu0
    %2200 = vmatpush.bf16.msra.mxu0 %v1613
    %2201 = vmatpush.bf16.msra.mxu0 %v1609
    %2202 = vmatpush.bf16.msra.mxu0 %v1605
    %2203 = vmatpush.bf16.msra.mxu0 %v1601
    %2204 = vmatpush.bf16.msra.mxu0 %v1597
    %2205 = vmatpush.bf16.msra.mxu0 %v1593
    %2206 = vmatpush.bf16.msra.mxu0 %v1589
    %2207 = vmatpush.bf16.msra.mxu0 %v1585
    %2208 = vmatmul.bf16.gmra.mxu0 %v542
    %v2209 = vpop.f32.mrf.mxu0
    %v2210 = vadd.f32 %v809, %v2209
    %v2211 = vpop.f32.mrf.mxu0
    %2212 = vdwg.mxu0
    %2213 = vmatpush.bf16.msra.mxu0 %v1645
    %2214 = vmatpush.bf16.msra.mxu0 %v1641
    %2215 = vmatpush.bf16.msra.mxu0 %v1637
    %2216 = vmatpush.bf16.msra.mxu0 %v1633
    %2217 = vmatpush.bf16.msra.mxu0 %v1629
    %2218 = vmatpush.bf16.msra.mxu0 %v1625
    %2219 = vmatpush.bf16.msra.mxu0 %v1621
    %2220 = vmatpush.bf16.msra.mxu0 %v1617
    %2221 = vmatmul.bf16.gmra.mxu0 %v543
    %v2222 = vpop.f32.mrf.mxu0
    %v2223 = vadd.f32 %v2210, %v2222
    %v2224 = vpop.f32.mrf.mxu0
    %2225 = vdwg.mxu0
    %2226 = vmatpush.bf16.msra.mxu0 %v1677
    %2227 = vmatpush.bf16.msra.mxu0 %v1673
    %2228 = vmatpush.bf16.msra.mxu0 %v1669
    %2229 = vmatpush.bf16.msra.mxu0 %v1665
    %2230 = vmatpush.bf16.msra.mxu0 %v1661
    %2231 = vmatpush.bf16.msra.mxu0 %v1657
    %2232 = vmatpush.bf16.msra.mxu0 %v1653
    %2233 = vmatpush.bf16.msra.mxu0 %v1649
    %2234 = vmatmul.bf16.gmra.mxu0 %v544
    %v2235 = vpop.f32.mrf.mxu0
    %v2236 = vadd.f32 %v2223, %v2235
    %v2237 = vpop.f32.mrf.mxu0
    %2238 = vdwg.mxu0
    %2239 = vmatpush.bf16.msra.mxu0 %v1709
    %2240 = vmatpush.bf16.msra.mxu0 %v1705
    %2241 = vmatpush.bf16.msra.mxu0 %v1701
    %2242 = vmatpush.bf16.msra.mxu0 %v1697
    %2243 = vmatpush.bf16.msra.mxu0 %v1693
    %2244 = vmatpush.bf16.msra.mxu0 %v1689
    %2245 = vmatpush.bf16.msra.mxu0 %v1685
    %2246 = vmatpush.bf16.msra.mxu0 %v1681
    %2247 = vmatmul.bf16.gmra.mxu0 %v545
    %v2248 = vpop.f32.mrf.mxu0
    %v2249 = vadd.f32 %v2236, %v2248
    %v2250 = vpop.f32.mrf.mxu0
    %2251 = vdwg.mxu0
    %2252 = vmatpush.bf16.msra.mxu0 %v1741
    %2253 = vmatpush.bf16.msra.mxu0 %v1737
    %2254 = vmatpush.bf16.msra.mxu0 %v1733
    %2255 = vmatpush.bf16.msra.mxu0 %v1729
    %2256 = vmatpush.bf16.msra.mxu0 %v1725
    %2257 = vmatpush.bf16.msra.mxu0 %v1721
    %2258 = vmatpush.bf16.msra.mxu0 %v1717
    %2259 = vmatpush.bf16.msra.mxu0 %v1713
    %2260 = vmatmul.bf16.gmra.mxu0 %v546
    %v2261 = vpop.f32.mrf.mxu0
    %v2262 = vadd.f32 %v2249, %v2261
    %v2263 = vpop.f32.mrf.mxu0
    %2264 = vdwg.mxu0
    %2265 = vmatpush.bf16.msra.mxu0 %v1773
    %2266 = vmatpush.bf16.msra.mxu0 %v1769
    %2267 = vmatpush.bf16.msra.mxu0 %v1765
    %2268 = vmatpush.bf16.msra.mxu0 %v1761
    %2269 = vmatpush.bf16.msra.mxu0 %v1757
    %2270 = vmatpush.bf16.msra.mxu0 %v1753
    %2271 = vmatpush.bf16.msra.mxu0 %v1749
    %2272 = vmatpush.bf16.msra.mxu0 %v1745
    %2273 = vmatmul.bf16.gmra.mxu0 %v547
    %v2274 = vpop.f32.mrf.mxu0
    %v2275 = vadd.f32 %v2262, %v2274
    %v2276 = vpop.f32.mrf.mxu0
    %2277 = vdwg.mxu0
    %2278 = vmatpush.bf16.msra.mxu0 %v1805
    %2279 = vmatpush.bf16.msra.mxu0 %v1801
    %2280 = vmatpush.bf16.msra.mxu0 %v1797
    %2281 = vmatpush.bf16.msra.mxu0 %v1793
    %2282 = vmatpush.bf16.msra.mxu0 %v1789
    %2283 = vmatpush.bf16.msra.mxu0 %v1785
    %2284 = vmatpush.bf16.msra.mxu0 %v1781
    %2285 = vmatpush.bf16.msra.mxu0 %v1777
    %2286 = vmatmul.bf16.gmra.mxu0 %v548
    %v2287 = vpop.f32.mrf.mxu0
    %v2288 = vadd.f32 %v2275, %v2287
    %v2289 = vpop.f32.mrf.mxu0
    %2290 = vdwg.mxu0
    %2291 = vmatpush.bf16.msra.mxu0 %v1837
    %2292 = vmatpush.bf16.msra.mxu0 %v1833
    %2293 = vmatpush.bf16.msra.mxu0 %v1829
    %2294 = vmatpush.bf16.msra.mxu0 %v1825
    %2295 = vmatpush.bf16.msra.mxu0 %v1821
    %2296 = vmatpush.bf16.msra.mxu0 %v1817
    %2297 = vmatpush.bf16.msra.mxu0 %v1813
    %2298 = vmatpush.bf16.msra.mxu0 %v1809
    %2299 = vmatmul.bf16.gmra.mxu0 %v549
    %v2300 = vpop.f32.mrf.mxu0
    %v2301 = vadd.f32 %v2288, %v2300
    %v2302 = vpop.f32.mrf.mxu0
    %2303 = vdwg.mxu0
    %2304 = vmatpush.bf16.msra.mxu0 %v1614
    %2305 = vmatpush.bf16.msra.mxu0 %v1610
    %2306 = vmatpush.bf16.msra.mxu0 %v1606
    %2307 = vmatpush.bf16.msra.mxu0 %v1602
    %2308 = vmatpush.bf16.msra.mxu0 %v1598
    %2309 = vmatpush.bf16.msra.mxu0 %v1594
    %2310 = vmatpush.bf16.msra.mxu0 %v1590
    %2311 = vmatpush.bf16.msra.mxu0 %v1586
    %2312 = vmatmul.bf16.gmra.mxu0 %v542
    %v2313 = vpop.f32.mrf.mxu0
    %v2314 = vadd.f32 %v810, %v2313
    %v2315 = vpop.f32.mrf.mxu0
    %2316 = vdwg.mxu0
    %2317 = vmatpush.bf16.msra.mxu0 %v1646
    %2318 = vmatpush.bf16.msra.mxu0 %v1642
    %2319 = vmatpush.bf16.msra.mxu0 %v1638
    %2320 = vmatpush.bf16.msra.mxu0 %v1634
    %2321 = vmatpush.bf16.msra.mxu0 %v1630
    %2322 = vmatpush.bf16.msra.mxu0 %v1626
    %2323 = vmatpush.bf16.msra.mxu0 %v1622
    %2324 = vmatpush.bf16.msra.mxu0 %v1618
    %2325 = vmatmul.bf16.gmra.mxu0 %v543
    %v2326 = vpop.f32.mrf.mxu0
    %v2327 = vadd.f32 %v2314, %v2326
    %v2328 = vpop.f32.mrf.mxu0
    %2329 = vdwg.mxu0
    %2330 = vmatpush.bf16.msra.mxu0 %v1678
    %2331 = vmatpush.bf16.msra.mxu0 %v1674
    %2332 = vmatpush.bf16.msra.mxu0 %v1670
    %2333 = vmatpush.bf16.msra.mxu0 %v1666
    %2334 = vmatpush.bf16.msra.mxu0 %v1662
    %2335 = vmatpush.bf16.msra.mxu0 %v1658
    %2336 = vmatpush.bf16.msra.mxu0 %v1654
    %2337 = vmatpush.bf16.msra.mxu0 %v1650
    %2338 = vmatmul.bf16.gmra.mxu0 %v544
    %v2339 = vpop.f32.mrf.mxu0
    %v2340 = vadd.f32 %v2327, %v2339
    %v2341 = vpop.f32.mrf.mxu0
    %2342 = vdwg.mxu0
    %2343 = vmatpush.bf16.msra.mxu0 %v1710
    %2344 = vmatpush.bf16.msra.mxu0 %v1706
    %2345 = vmatpush.bf16.msra.mxu0 %v1702
    %2346 = vmatpush.bf16.msra.mxu0 %v1698
    %2347 = vmatpush.bf16.msra.mxu0 %v1694
    %2348 = vmatpush.bf16.msra.mxu0 %v1690
    %2349 = vmatpush.bf16.msra.mxu0 %v1686
    %2350 = vmatpush.bf16.msra.mxu0 %v1682
    %2351 = vmatmul.bf16.gmra.mxu0 %v545
    %v2352 = vpop.f32.mrf.mxu0
    %v2353 = vadd.f32 %v2340, %v2352
    %v2354 = vpop.f32.mrf.mxu0
    %2355 = vdwg.mxu0
    %2356 = vmatpush.bf16.msra.mxu0 %v1742
    %2357 = vmatpush.bf16.msra.mxu0 %v1738
    %2358 = vmatpush.bf16.msra.mxu0 %v1734
    %2359 = vmatpush.bf16.msra.mxu0 %v1730
    %2360 = vmatpush.bf16.msra.mxu0 %v1726
    %2361 = vmatpush.bf16.msra.mxu0 %v1722
    %2362 = vmatpush.bf16.msra.mxu0 %v1718
    %2363 = vmatpush.bf16.msra.mxu0 %v1714
    %2364 = vmatmul.bf16.gmra.mxu0 %v546
    %v2365 = vpop.f32.mrf.mxu0
    %v2366 = vadd.f32 %v2353, %v2365
    %v2367 = vpop.f32.mrf.mxu0
    %2368 = vdwg.mxu0
    %2369 = vmatpush.bf16.msra.mxu0 %v1774
    %2370 = vmatpush.bf16.msra.mxu0 %v1770
    %2371 = vmatpush.bf16.msra.mxu0 %v1766
    %2372 = vmatpush.bf16.msra.mxu0 %v1762
    %2373 = vmatpush.bf16.msra.mxu0 %v1758
    %2374 = vmatpush.bf16.msra.mxu0 %v1754
    %2375 = vmatpush.bf16.msra.mxu0 %v1750
    %2376 = vmatpush.bf16.msra.mxu0 %v1746
    %2377 = vmatmul.bf16.gmra.mxu0 %v547
    %v2378 = vpop.f32.mrf.mxu0
    %v2379 = vadd.f32 %v2366, %v2378
    %v2380 = vpop.f32.mrf.mxu0
    %2381 = vdwg.mxu0
    %2382 = vmatpush.bf16.msra.mxu0 %v1806
    %2383 = vmatpush.bf16.msra.mxu0 %v1802
    %2384 = vmatpush.bf16.msra.mxu0 %v1798
    %2385 = vmatpush.bf16.msra.mxu0 %v1794
    %2386 = vmatpush.bf16.msra.mxu0 %v1790
    %2387 = vmatpush.bf16.msra.mxu0 %v1786
    %2388 = vmatpush.bf16.msra.mxu0 %v1782
    %2389 = vmatpush.bf16.msra.mxu0 %v1778
    %2390 = vmatmul.bf16.gmra.mxu0 %v548
    %v2391 = vpop.f32.mrf.mxu0
    %v2392 = vadd.f32 %v2379, %v2391
    %v2393 = vpop.f32.mrf.mxu0
    %2394 = vdwg.mxu0
    %2395 = vmatpush.bf16.msra.mxu0 %v1838
    %2396 = vmatpush.bf16.msra.mxu0 %v1834
    %2397 = vmatpush.bf16.msra.mxu0 %v1830
    %2398 = vmatpush.bf16.msra.mxu0 %v1826
    %2399 = vmatpush.bf16.msra.mxu0 %v1822
    %2400 = vmatpush.bf16.msra.mxu0 %v1818
    %2401 = vmatpush.bf16.msra.mxu0 %v1814
    %2402 = vmatpush.bf16.msra.mxu0 %v1810
    %2403 = vmatmul.bf16.gmra.mxu0 %v549
    %v2404 = vpop.f32.mrf.mxu0
    %v2405 = vadd.f32 %v2392, %v2404
    %v2406 = vpop.f32.mrf.mxu0
    %2407 = vdwg.mxu0
    %2408 = vmatpush.bf16.msra.mxu0 %v1615
    %2409 = vmatpush.bf16.msra.mxu0 %v1611
    %2410 = vmatpush.bf16.msra.mxu0 %v1607
    %2411 = vmatpush.bf16.msra.mxu0 %v1603
    %2412 = vmatpush.bf16.msra.mxu0 %v1599
    %2413 = vmatpush.bf16.msra.mxu0 %v1595
    %2414 = vmatpush.bf16.msra.mxu0 %v1591
    %2415 = vmatpush.bf16.msra.mxu0 %v1587
    %2416 = vmatmul.bf16.gmra.mxu0 %v542
    %v2417 = vpop.f32.mrf.mxu0
    %v2418 = vadd.f32 %v811, %v2417
    %v2419 = vpop.f32.mrf.mxu0
    %2420 = vdwg.mxu0
    %2421 = vmatpush.bf16.msra.mxu0 %v1647
    %2422 = vmatpush.bf16.msra.mxu0 %v1643
    %2423 = vmatpush.bf16.msra.mxu0 %v1639
    %2424 = vmatpush.bf16.msra.mxu0 %v1635
    %2425 = vmatpush.bf16.msra.mxu0 %v1631
    %2426 = vmatpush.bf16.msra.mxu0 %v1627
    %2427 = vmatpush.bf16.msra.mxu0 %v1623
    %2428 = vmatpush.bf16.msra.mxu0 %v1619
    %2429 = vmatmul.bf16.gmra.mxu0 %v543
    %v2430 = vpop.f32.mrf.mxu0
    %v2431 = vadd.f32 %v2418, %v2430
    %v2432 = vpop.f32.mrf.mxu0
    %2433 = vdwg.mxu0
    %2434 = vmatpush.bf16.msra.mxu0 %v1679
    %2435 = vmatpush.bf16.msra.mxu0 %v1675
    %2436 = vmatpush.bf16.msra.mxu0 %v1671
    %2437 = vmatpush.bf16.msra.mxu0 %v1667
    %2438 = vmatpush.bf16.msra.mxu0 %v1663
    %2439 = vmatpush.bf16.msra.mxu0 %v1659
    %2440 = vmatpush.bf16.msra.mxu0 %v1655
    %2441 = vmatpush.bf16.msra.mxu0 %v1651
    %2442 = vmatmul.bf16.gmra.mxu0 %v544
    %v2443 = vpop.f32.mrf.mxu0
    %v2444 = vadd.f32 %v2431, %v2443
    %v2445 = vpop.f32.mrf.mxu0
    %2446 = vdwg.mxu0
    %2447 = vmatpush.bf16.msra.mxu0 %v1711
    %2448 = vmatpush.bf16.msra.mxu0 %v1707
    %2449 = vmatpush.bf16.msra.mxu0 %v1703
    %2450 = vmatpush.bf16.msra.mxu0 %v1699
    %2451 = vmatpush.bf16.msra.mxu0 %v1695
    %2452 = vmatpush.bf16.msra.mxu0 %v1691
    %2453 = vmatpush.bf16.msra.mxu0 %v1687
    %2454 = vmatpush.bf16.msra.mxu0 %v1683
    %2455 = vmatmul.bf16.gmra.mxu0 %v545
    %v2456 = vpop.f32.mrf.mxu0
    %v2457 = vadd.f32 %v2444, %v2456
    %v2458 = vpop.f32.mrf.mxu0
    %2459 = vdwg.mxu0
    %2460 = vmatpush.bf16.msra.mxu0 %v1743
    %2461 = vmatpush.bf16.msra.mxu0 %v1739
    %2462 = vmatpush.bf16.msra.mxu0 %v1735
    %2463 = vmatpush.bf16.msra.mxu0 %v1731
    %2464 = vmatpush.bf16.msra.mxu0 %v1727
    %2465 = vmatpush.bf16.msra.mxu0 %v1723
    %2466 = vmatpush.bf16.msra.mxu0 %v1719
    %2467 = vmatpush.bf16.msra.mxu0 %v1715
    %2468 = vmatmul.bf16.gmra.mxu0 %v546
    %v2469 = vpop.f32.mrf.mxu0
    %v2470 = vadd.f32 %v2457, %v2469
    %v2471 = vpop.f32.mrf.mxu0
    %2472 = vdwg.mxu0
    %2473 = vmatpush.bf16.msra.mxu0 %v1775
    %2474 = vmatpush.bf16.msra.mxu0 %v1771
    %2475 = vmatpush.bf16.msra.mxu0 %v1767
    %2476 = vmatpush.bf16.msra.mxu0 %v1763
    %2477 = vmatpush.bf16.msra.mxu0 %v1759
    %2478 = vmatpush.bf16.msra.mxu0 %v1755
    %2479 = vmatpush.bf16.msra.mxu0 %v1751
    %2480 = vmatpush.bf16.msra.mxu0 %v1747
    %2481 = vmatmul.bf16.gmra.mxu0 %v547
    %v2482 = vpop.f32.mrf.mxu0
    %v2483 = vadd.f32 %v2470, %v2482
    %v2484 = vpop.f32.mrf.mxu0
    %2485 = vdwg.mxu0
    %2486 = vmatpush.bf16.msra.mxu0 %v1807
    %2487 = vmatpush.bf16.msra.mxu0 %v1803
    %2488 = vmatpush.bf16.msra.mxu0 %v1799
    %2489 = vmatpush.bf16.msra.mxu0 %v1795
    %2490 = vmatpush.bf16.msra.mxu0 %v1791
    %2491 = vmatpush.bf16.msra.mxu0 %v1787
    %2492 = vmatpush.bf16.msra.mxu0 %v1783
    %2493 = vmatpush.bf16.msra.mxu0 %v1779
    %2494 = vmatmul.bf16.gmra.mxu0 %v548
    %v2495 = vpop.f32.mrf.mxu0
    %v2496 = vadd.f32 %v2483, %v2495
    %v2497 = vpop.f32.mrf.mxu0
    %2498 = vdwg.mxu0
    %2499 = vmatpush.bf16.msra.mxu0 %v1839
    %2500 = vmatpush.bf16.msra.mxu0 %v1835
    %2501 = vmatpush.bf16.msra.mxu0 %v1831
    %2502 = vmatpush.bf16.msra.mxu0 %v1827
    %2503 = vmatpush.bf16.msra.mxu0 %v1823
    %2504 = vmatpush.bf16.msra.mxu0 %v1819
    %2505 = vmatpush.bf16.msra.mxu0 %v1815
    %2506 = vmatpush.bf16.msra.mxu0 %v1811
    %2507 = vmatmul.bf16.gmra.mxu0 %v549
    %v2508 = vpop.f32.mrf.mxu0
    %v2509 = vadd.f32 %v2496, %v2508
    %v2510 = vpop.f32.mrf.mxu0
    %2511 = vdwg.mxu0
    %v2512 = vld [vmem:[#allocation13] sm:$0xf]
    %v2513 = vld [vmem:[#allocation14] sm:$0xf]
    %v2514 = vadd.f32 %v2197, %v2301
    %v2515 = vadd.f32 %v2514, %v2405
    %v2516 = vadd.f32 %v2515, %v2509
    %2517 = vadd.xlane.f32.xlu0 %v2516
    %v2518 = vpop.xlane.xlu0 %2517
    %v2519 = vrcp.pop 512.0
    %v2520 = vmul.f32 512.0, %v2519
    %v2521 = vsub.f32 1.0, %v2520
    %v2522 = vmul.f32 %v2519, %v2521
    %v2523 = vadd.f32 %v2519, %v2522
    %vm2524 = vweird.f32 %v2519
    %v2525 = vsel %vm2524, %v2519, %v2523
    %v2526 = vmul.f32 %v2518, %v2525
    %v2527 = vsub.f32 %v2197, %v2526
    %v2528 = vsub.f32 %v2301, %v2526
    %v2529 = vsub.f32 %v2405, %v2526
    %v2530 = vsub.f32 %v2509, %v2526
    %v2531 = vmul.f32 %v2527, %v2527
    %v2532 = vmul.f32 %v2528, %v2528
    %v2533 = vmul.f32 %v2529, %v2529
    %v2534 = vmul.f32 %v2530, %v2530
    %v2535 = vadd.f32 %v2531, %v2532
    %v2536 = vadd.f32 %v2535, %v2533
    %v2537 = vadd.f32 %v2536, %v2534
    %2538 = vadd.xlane.f32.xlu0 %v2537
    %v2539 = vpop.xlane.xlu0 %2538
    %v2540 = vmul.f32 %v2539, %v2525
    %v2541 = vadd.f32 %v2540, 1e-05
    %v2542 = vrsqrt.pop %v2541
    %v2543 = vmul.f32 %v2542, %v2541
    %v2544 = vmul.f32 %v2543, %v2542
    %v2545 = vmul.f32 0.5, %v2544
    %v2546 = vsub.f32 1.5, %v2545
    %v2547 = vmul.f32 %v2542, %v2546
    %vm2548 = vweird.f32 %v2541
    %vm2549 = vweird.f32 %v2542
    %vm2550 = vmor %vm2548, %vm2549
    %v2551 = vsel %vm2550, %v2542, %v2547
    %v2552 = vmul.f32 %v2527, %v2551
    %v2553 = vmul.f32 %v2528, %v2551
    %v2554 = vmul.f32 %v2529, %v2551
    %v2555 = vmul.f32 %v2530, %v2551
    %v2557 = vperm.slane %v2512, 0
    %v2558 = vperm.slane %v2512, 1
    %v2559 = vperm.slane %v2512, 2
    %v2560 = vperm.slane %v2512, 3
    %v2565 = vmul.f32 %v2552, %v2557
    %v2566 = vmul.f32 %v2553, %v2558
    %v2567 = vmul.f32 %v2554, %v2559
    %v2568 = vmul.f32 %v2555, %v2560
    %v2570 = vperm.slane %v2513, 0
    %v2571 = vperm.slane %v2513, 1
    %v2572 = vperm.slane %v2513, 2
    %v2573 = vperm.slane %v2513, 3
    %v2578 = vadd.f32 %v2565, %v2570
    %v2579 = vadd.f32 %v2566, %v2571
    %v2580 = vadd.f32 %v2567, %v2572
    %v2581 = vadd.f32 %v2568, %v2573
    %v2582 = vmax.f32 %v2578, 0.0
    %v2583 = vmax.f32 %v2579, 0.0
    %v2584 = vmax.f32 %v2580, 0.0
    %v2585 = vmax.f32 %v2581, 0.0
    %v2586 = vpack.c.bf16 %v2582, %v2582
    %v2587 = vpack.c.bf16 %v2583, %v2583
    %v2588 = vpack.c.bf16 %v2584, %v2584
    %v2589 = vpack.c.bf16 %v2585, %v2585
    %v2590 = vld [vmem:[#allocation16] sm:$0xff]
    %v2591 = vld [vmem:[#allocation16 + $0x8] sm:$0xff]
    %v2592 = vld [vmem:[#allocation16 + $0x10] sm:$0xff]
    %v2593 = vld [vmem:[#allocation16 + $0x18] sm:$0xff]
    %v2594 = vld [vmem:[#allocation16 + $0x20] sm:$0xff]
    %v2595 = vld [vmem:[#allocation16 + $0x28] sm:$0xff]
    %v2596 = vld [vmem:[#allocation16 + $0x30] sm:$0xff]
    %v2597 = vld [vmem:[#allocation16 + $0x38] sm:$0xff]
    %v2598 = vld [vmem:[#allocation16 + $0x40] sm:$0xff]
    %v2599 = vld [vmem:[#allocation16 + $0x48] sm:$0xff]
    %v2600 = vld [vmem:[#allocation16 + $0x50] sm:$0xff]
    %v2601 = vld [vmem:[#allocation16 + $0x58] sm:$0xff]
    %v2602 = vld [vmem:[#allocation16 + $0x60] sm:$0xff]
    %v2603 = vld [vmem:[#allocation16 + $0x68] sm:$0xff]
    %v2604 = vld [vmem:[#allocation16 + $0x70] sm:$0xff]
    %v2605 = vld [vmem:[#allocation16 + $0x78] sm:$0xff]
    %v2606 = vld [vmem:[#allocation16 + $0x80] sm:$0xff]
    %v2607 = vld [vmem:[#allocation16 + $0x88] sm:$0xff]
    %v2608 = vld [vmem:[#allocation16 + $0x90] sm:$0xff]
    %v2609 = vld [vmem:[#allocation16 + $0x98] sm:$0xff]
    %v2610 = vld [vmem:[#allocation16 + $0xa0] sm:$0xff]
    %v2611 = vld [vmem:[#allocation16 + $0xa8] sm:$0xff]
    %v2612 = vld [vmem:[#allocation16 + $0xb0] sm:$0xff]
    %v2613 = vld [vmem:[#allocation16 + $0xb8] sm:$0xff]
    %v2614 = vld [vmem:[#allocation16 + $0xc0] sm:$0xff]
    %v2615 = vld [vmem:[#allocation16 + $0xc8] sm:$0xff]
    %v2616 = vld [vmem:[#allocation16 + $0xd0] sm:$0xff]
    %v2617 = vld [vmem:[#allocation16 + $0xd8] sm:$0xff]
    %v2618 = vld [vmem:[#allocation16 + $0xe0] sm:$0xff]
    %v2619 = vld [vmem:[#allocation16 + $0xe8] sm:$0xff]
    %v2620 = vld [vmem:[#allocation16 + $0xf0] sm:$0xff]
    %v2621 = vld [vmem:[#allocation16 + $0xf8] sm:$0xff]
    %v2622 = vld [vmem:[#allocation16 + $0x100] sm:$0xff]
    %v2623 = vld [vmem:[#allocation16 + $0x108] sm:$0xff]
    %v2624 = vld [vmem:[#allocation16 + $0x110] sm:$0xff]
    %v2625 = vld [vmem:[#allocation16 + $0x118] sm:$0xff]
    %v2626 = vld [vmem:[#allocation16 + $0x120] sm:$0xff]
    %v2627 = vld [vmem:[#allocation16 + $0x128] sm:$0xff]
    %v2628 = vld [vmem:[#allocation16 + $0x130] sm:$0xff]
    %v2629 = vld [vmem:[#allocation16 + $0x138] sm:$0xff]
    %v2630 = vld [vmem:[#allocation16 + $0x140] sm:$0xff]
    %v2631 = vld [vmem:[#allocation16 + $0x148] sm:$0xff]
    %v2632 = vld [vmem:[#allocation16 + $0x150] sm:$0xff]
    %v2633 = vld [vmem:[#allocation16 + $0x158] sm:$0xff]
    %v2634 = vld [vmem:[#allocation16 + $0x160] sm:$0xff]
    %v2635 = vld [vmem:[#allocation16 + $0x168] sm:$0xff]
    %v2636 = vld [vmem:[#allocation16 + $0x170] sm:$0xff]
    %v2637 = vld [vmem:[#allocation16 + $0x178] sm:$0xff]
    %v2638 = vld [vmem:[#allocation16 + $0x180] sm:$0xff]
    %v2639 = vld [vmem:[#allocation16 + $0x188] sm:$0xff]
    %v2640 = vld [vmem:[#allocation16 + $0x190] sm:$0xff]
    %v2641 = vld [vmem:[#allocation16 + $0x198] sm:$0xff]
    %v2642 = vld [vmem:[#allocation16 + $0x1a0] sm:$0xff]
    %v2643 = vld [vmem:[#allocation16 + $0x1a8] sm:$0xff]
    %v2644 = vld [vmem:[#allocation16 + $0x1b0] sm:$0xff]
    %v2645 = vld [vmem:[#allocation16 + $0x1b8] sm:$0xff]
    %v2646 = vld [vmem:[#allocation16 + $0x1c0] sm:$0xff]
    %v2647 = vld [vmem:[#allocation16 + $0x1c8] sm:$0xff]
    %v2648 = vld [vmem:[#allocation16 + $0x1d0] sm:$0xff]
    %v2649 = vld [vmem:[#allocation16 + $0x1d8] sm:$0xff]
    %v2650 = vld [vmem:[#allocation16 + $0x1e0] sm:$0xff]
    %v2651 = vld [vmem:[#allocation16 + $0x1e8] sm:$0xff]
    %v2652 = vld [vmem:[#allocation16 + $0x1f0] sm:$0xff]
    %v2653 = vld [vmem:[#allocation16 + $0x1f8] sm:$0xff]
    %v2654 = vld [vmem:[%s10] sm:$0x3]
    %v2656 = vperm.slane %v2654, 0
    %v2657 = vperm.slane %v2654, 1
    %v2724 = vunpack.c.l.b16 %v2590
    %v2725 = vunpack.c.h.b16 %v2590
    %v2726 = vunpack.c.l.b16 %v2591
    %v2727 = vunpack.c.h.b16 %v2591
    %v2728 = vunpack.c.l.b16 %v2592
    %v2729 = vunpack.c.h.b16 %v2592
    %v2730 = vunpack.c.l.b16 %v2593
    %v2731 = vunpack.c.h.b16 %v2593
    %v2732 = vunpack.c.l.b16 %v2594
    %v2733 = vunpack.c.h.b16 %v2594
    %v2734 = vunpack.c.l.b16 %v2595
    %v2735 = vunpack.c.h.b16 %v2595
    %v2736 = vunpack.c.l.b16 %v2596
    %v2737 = vunpack.c.h.b16 %v2596
    %v2738 = vunpack.c.l.b16 %v2597
    %v2739 = vunpack.c.h.b16 %v2597
    %v2740 = vunpack.c.l.b16 %v2598
    %v2741 = vunpack.c.h.b16 %v2598
    %v2742 = vunpack.c.l.b16 %v2599
    %v2743 = vunpack.c.h.b16 %v2599
    %v2744 = vunpack.c.l.b16 %v2600
    %v2745 = vunpack.c.h.b16 %v2600
    %v2746 = vunpack.c.l.b16 %v2601
    %v2747 = vunpack.c.h.b16 %v2601
    %v2748 = vunpack.c.l.b16 %v2602
    %v2749 = vunpack.c.h.b16 %v2602
    %v2750 = vunpack.c.l.b16 %v2603
    %v2751 = vunpack.c.h.b16 %v2603
    %v2752 = vunpack.c.l.b16 %v2604
    %v2753 = vunpack.c.h.b16 %v2604
    %v2754 = vunpack.c.l.b16 %v2605
    %v2755 = vunpack.c.h.b16 %v2605
    %v2756 = vunpack.c.l.b16 %v2606
    %v2757 = vunpack.c.h.b16 %v2606
    %v2758 = vunpack.c.l.b16 %v2607
    %v2759 = vunpack.c.h.b16 %v2607
    %v2760 = vunpack.c.l.b16 %v2608
    %v2761 = vunpack.c.h.b16 %v2608
    %v2762 = vunpack.c.l.b16 %v2609
    %v2763 = vunpack.c.h.b16 %v2609
    %v2764 = vunpack.c.l.b16 %v2610
    %v2765 = vunpack.c.h.b16 %v2610
    %v2766 = vunpack.c.l.b16 %v2611
    %v2767 = vunpack.c.h.b16 %v2611
    %v2768 = vunpack.c.l.b16 %v2612
    %v2769 = vunpack.c.h.b16 %v2612
    %v2770 = vunpack.c.l.b16 %v2613
    %v2771 = vunpack.c.h.b16 %v2613
    %v2772 = vunpack.c.l.b16 %v2614
    %v2773 = vunpack.c.h.b16 %v2614
    %v2774 = vunpack.c.l.b16 %v2615
    %v2775 = vunpack.c.h.b16 %v2615
    %v2776 = vunpack.c.l.b16 %v2616
    %v2777 = vunpack.c.h.b16 %v2616
    %v2778 = vunpack.c.l.b16 %v2617
    %v2779 = vunpack.c.h.b16 %v2617
    %v2780 = vunpack.c.l.b16 %v2618
    %v2781 = vunpack.c.h.b16 %v2618
    %v2782 = vunpack.c.l.b16 %v2619
    %v2783 = vunpack.c.h.b16 %v2619
    %v2784 = vunpack.c.l.b16 %v2620
    %v2785 = vunpack.c.h.b16 %v2620
    %v2786 = vunpack.c.l.b16 %v2621
    %v2787 = vunpack.c.h.b16 %v2621
    %v2788 = vunpack.c.l.b16 %v2622
    %v2789 = vunpack.c.h.b16 %v2622
    %v2790 = vunpack.c.l.b16 %v2623
    %v2791 = vunpack.c.h.b16 %v2623
    %v2792 = vunpack.c.l.b16 %v2624
    %v2793 = vunpack.c.h.b16 %v2624
    %v2794 = vunpack.c.l.b16 %v2625
    %v2795 = vunpack.c.h.b16 %v2625
    %v2796 = vunpack.c.l.b16 %v2626
    %v2797 = vunpack.c.h.b16 %v2626
    %v2798 = vunpack.c.l.b16 %v2627
    %v2799 = vunpack.c.h.b16 %v2627
    %v2800 = vunpack.c.l.b16 %v2628
    %v2801 = vunpack.c.h.b16 %v2628
    %v2802 = vunpack.c.l.b16 %v2629
    %v2803 = vunpack.c.h.b16 %v2629
    %v2804 = vunpack.c.l.b16 %v2630
    %v2805 = vunpack.c.h.b16 %v2630
    %v2806 = vunpack.c.l.b16 %v2631
    %v2807 = vunpack.c.h.b16 %v2631
    %v2808 = vunpack.c.l.b16 %v2632
    %v2809 = vunpack.c.h.b16 %v2632
    %v2810 = vunpack.c.l.b16 %v2633
    %v2811 = vunpack.c.h.b16 %v2633
    %v2812 = vunpack.c.l.b16 %v2634
    %v2813 = vunpack.c.h.b16 %v2634
    %v2814 = vunpack.c.l.b16 %v2635
    %v2815 = vunpack.c.h.b16 %v2635
    %v2816 = vunpack.c.l.b16 %v2636
    %v2817 = vunpack.c.h.b16 %v2636
    %v2818 = vunpack.c.l.b16 %v2637
    %v2819 = vunpack.c.h.b16 %v2637
    %v2820 = vunpack.c.l.b16 %v2638
    %v2821 = vunpack.c.h.b16 %v2638
    %v2822 = vunpack.c.l.b16 %v2639
    %v2823 = vunpack.c.h.b16 %v2639
    %v2824 = vunpack.c.l.b16 %v2640
    %v2825 = vunpack.c.h.b16 %v2640
    %v2826 = vunpack.c.l.b16 %v2641
    %v2827 = vunpack.c.h.b16 %v2641
    %v2828 = vunpack.c.l.b16 %v2642
    %v2829 = vunpack.c.h.b16 %v2642
    %v2830 = vunpack.c.l.b16 %v2643
    %v2831 = vunpack.c.h.b16 %v2643
    %v2832 = vunpack.c.l.b16 %v2644
    %v2833 = vunpack.c.h.b16 %v2644
    %v2834 = vunpack.c.l.b16 %v2645
    %v2835 = vunpack.c.h.b16 %v2645
    %v2836 = vunpack.c.l.b16 %v2646
    %v2837 = vunpack.c.h.b16 %v2646
    %v2838 = vunpack.c.l.b16 %v2647
    %v2839 = vunpack.c.h.b16 %v2647
    %v2840 = vunpack.c.l.b16 %v2648
    %v2841 = vunpack.c.h.b16 %v2648
    %v2842 = vunpack.c.l.b16 %v2649
    %v2843 = vunpack.c.h.b16 %v2649
    %v2844 = vunpack.c.l.b16 %v2650
    %v2845 = vunpack.c.h.b16 %v2650
    %v2846 = vunpack.c.l.b16 %v2651
    %v2847 = vunpack.c.h.b16 %v2651
    %v2848 = vunpack.c.l.b16 %v2652
    %v2849 = vunpack.c.h.b16 %v2652
    %v2850 = vunpack.c.l.b16 %v2653
    %v2851 = vunpack.c.h.b16 %v2653
    %v2852 = vpack.c.b16 %v2726, %v2724
    %v2853 = vpack.c.b16 %v2727, %v2725
    %v2854 = vpack.c.b16 %v2730, %v2728
    %v2855 = vpack.c.b16 %v2731, %v2729
    %v2856 = vpack.c.b16 %v2734, %v2732
    %v2857 = vpack.c.b16 %v2735, %v2733
    %v2858 = vpack.c.b16 %v2738, %v2736
    %v2859 = vpack.c.b16 %v2739, %v2737
    %v2860 = vpack.c.b16 %v2742, %v2740
    %v2861 = vpack.c.b16 %v2743, %v2741
    %v2862 = vpack.c.b16 %v2746, %v2744
    %v2863 = vpack.c.b16 %v2747, %v2745
    %v2864 = vpack.c.b16 %v2750, %v2748
    %v2865 = vpack.c.b16 %v2751, %v2749
    %v2866 = vpack.c.b16 %v2754, %v2752
    %v2867 = vpack.c.b16 %v2755, %v2753
    %v2868 = vpack.c.b16 %v2758, %v2756
    %v2869 = vpack.c.b16 %v2759, %v2757
    %v2870 = vpack.c.b16 %v2762, %v2760
    %v2871 = vpack.c.b16 %v2763, %v2761
    %v2872 = vpack.c.b16 %v2766, %v2764
    %v2873 = vpack.c.b16 %v2767, %v2765
    %v2874 = vpack.c.b16 %v2770, %v2768
    %v2875 = vpack.c.b16 %v2771, %v2769
    %v2876 = vpack.c.b16 %v2774, %v2772
    %v2877 = vpack.c.b16 %v2775, %v2773
    %v2878 = vpack.c.b16 %v2778, %v2776
    %v2879 = vpack.c.b16 %v2779, %v2777
    %v2880 = vpack.c.b16 %v2782, %v2780
    %v2881 = vpack.c.b16 %v2783, %v2781
    %v2882 = vpack.c.b16 %v2786, %v2784
    %v2883 = vpack.c.b16 %v2787, %v2785
    %v2884 = vpack.c.b16 %v2790, %v2788
    %v2885 = vpack.c.b16 %v2791, %v2789
    %v2886 = vpack.c.b16 %v2794, %v2792
    %v2887 = vpack.c.b16 %v2795, %v2793
    %v2888 = vpack.c.b16 %v2798, %v2796
    %v2889 = vpack.c.b16 %v2799, %v2797
    %v2890 = vpack.c.b16 %v2802, %v2800
    %v2891 = vpack.c.b16 %v2803, %v2801
    %v2892 = vpack.c.b16 %v2806, %v2804
    %v2893 = vpack.c.b16 %v2807, %v2805
    %v2894 = vpack.c.b16 %v2810, %v2808
    %v2895 = vpack.c.b16 %v2811, %v2809
    %v2896 = vpack.c.b16 %v2814, %v2812
    %v2897 = vpack.c.b16 %v2815, %v2813
    %v2898 = vpack.c.b16 %v2818, %v2816
    %v2899 = vpack.c.b16 %v2819, %v2817
    %v2900 = vpack.c.b16 %v2822, %v2820
    %v2901 = vpack.c.b16 %v2823, %v2821
    %v2902 = vpack.c.b16 %v2826, %v2824
    %v2903 = vpack.c.b16 %v2827, %v2825
    %v2904 = vpack.c.b16 %v2830, %v2828
    %v2905 = vpack.c.b16 %v2831, %v2829
    %v2906 = vpack.c.b16 %v2834, %v2832
    %v2907 = vpack.c.b16 %v2835, %v2833
    %v2908 = vpack.c.b16 %v2838, %v2836
    %v2909 = vpack.c.b16 %v2839, %v2837
    %v2910 = vpack.c.b16 %v2842, %v2840
    %v2911 = vpack.c.b16 %v2843, %v2841
    %v2912 = vpack.c.b16 %v2846, %v2844
    %v2913 = vpack.c.b16 %v2847, %v2845
    %v2914 = vpack.c.b16 %v2850, %v2848
    %v2915 = vpack.c.b16 %v2851, %v2849
    %2980 = vmatpush.bf16.msra.mxu0 %v2866
    %2981 = vmatpush.bf16.msra.mxu0 %v2864
    %2982 = vmatpush.bf16.msra.mxu0 %v2862
    %2983 = vmatpush.bf16.msra.mxu0 %v2860
    %2984 = vmatpush.bf16.msra.mxu0 %v2858
    %2985 = vmatpush.bf16.msra.mxu0 %v2856
    %2986 = vmatpush.bf16.msra.mxu0 %v2854
    %2987 = vmatpush.bf16.msra.mxu0 %v2852
    %2988 = vmatmul.bf16.gmra.mxu0 %v2586
    %v2989 = vpop.f32.mrf.mxu0
    %v2990 = vadd.f32 %v2656, %v2989
    %v2991 = vpop.f32.mrf.mxu0
    %2992 = vdwg.mxu0
    %2993 = vmatpush.bf16.msra.mxu0 %v2882
    %2994 = vmatpush.bf16.msra.mxu0 %v2880
    %2995 = vmatpush.bf16.msra.mxu0 %v2878
    %2996 = vmatpush.bf16.msra.mxu0 %v2876
    %2997 = vmatpush.bf16.msra.mxu0 %v2874
    %2998 = vmatpush.bf16.msra.mxu0 %v2872
    %2999 = vmatpush.bf16.msra.mxu0 %v2870
    %3000 = vmatpush.bf16.msra.mxu0 %v2868
    %3001 = vmatmul.bf16.gmra.mxu0 %v2587
    %v3002 = vpop.f32.mrf.mxu0
    %v3003 = vadd.f32 %v2990, %v3002
    %v3004 = vpop.f32.mrf.mxu0
    %3005 = vdwg.mxu0
    %3006 = vmatpush.bf16.msra.mxu0 %v2898
    %3007 = vmatpush.bf16.msra.mxu0 %v2896
    %3008 = vmatpush.bf16.msra.mxu0 %v2894
    %3009 = vmatpush.bf16.msra.mxu0 %v2892
    %3010 = vmatpush.bf16.msra.mxu0 %v2890
    %3011 = vmatpush.bf16.msra.mxu0 %v2888
    %3012 = vmatpush.bf16.msra.mxu0 %v2886
    %3013 = vmatpush.bf16.msra.mxu0 %v2884
    %3014 = vmatmul.bf16.gmra.mxu0 %v2588
    %v3015 = vpop.f32.mrf.mxu0
    %v3016 = vadd.f32 %v3003, %v3015
    %v3017 = vpop.f32.mrf.mxu0
    %3018 = vdwg.mxu0
    %3019 = vmatpush.bf16.msra.mxu0 %v2914
    %3020 = vmatpush.bf16.msra.mxu0 %v2912
    %3021 = vmatpush.bf16.msra.mxu0 %v2910
    %3022 = vmatpush.bf16.msra.mxu0 %v2908
    %3023 = vmatpush.bf16.msra.mxu0 %v2906
    %3024 = vmatpush.bf16.msra.mxu0 %v2904
    %3025 = vmatpush.bf16.msra.mxu0 %v2902
    %3026 = vmatpush.bf16.msra.mxu0 %v2900
    %3027 = vmatmul.bf16.gmra.mxu0 %v2589
    %v3028 = vpop.f32.mrf.mxu0
    %v3029 = vadd.f32 %v3016, %v3028
    %v3030 = vpop.f32.mrf.mxu0
    %3031 = vdwg.mxu0
    %3032 = vmatpush.bf16.msra.mxu0 %v2867
    %3033 = vmatpush.bf16.msra.mxu0 %v2865
    %3034 = vmatpush.bf16.msra.mxu0 %v2863
    %3035 = vmatpush.bf16.msra.mxu0 %v2861
    %3036 = vmatpush.bf16.msra.mxu0 %v2859
    %3037 = vmatpush.bf16.msra.mxu0 %v2857
    %3038 = vmatpush.bf16.msra.mxu0 %v2855
    %3039 = vmatpush.bf16.msra.mxu0 %v2853
    %3040 = vmatmul.bf16.gmra.mxu0 %v2586
    %v3041 = vpop.f32.mrf.mxu0
    %v3042 = vadd.f32 %v2657, %v3041
    %v3043 = vpop.f32.mrf.mxu0
    %3044 = vdwg.mxu0
    %3045 = vmatpush.bf16.msra.mxu0 %v2883
    %3046 = vmatpush.bf16.msra.mxu0 %v2881
    %3047 = vmatpush.bf16.msra.mxu0 %v2879
    %3048 = vmatpush.bf16.msra.mxu0 %v2877
    %3049 = vmatpush.bf16.msra.mxu0 %v2875
    %3050 = vmatpush.bf16.msra.mxu0 %v2873
    %3051 = vmatpush.bf16.msra.mxu0 %v2871
    %3052 = vmatpush.bf16.msra.mxu0 %v2869
    %3053 = vmatmul.bf16.gmra.mxu0 %v2587
    %v3054 = vpop.f32.mrf.mxu0
    %v3055 = vadd.f32 %v3042, %v3054
    %v3056 = vpop.f32.mrf.mxu0
    %3057 = vdwg.mxu0
    %3058 = vmatpush.bf16.msra.mxu0 %v2899
    %3059 = vmatpush.bf16.msra.mxu0 %v2897
    %3060 = vmatpush.bf16.msra.mxu0 %v2895
    %3061 = vmatpush.bf16.msra.mxu0 %v2893
    %3062 = vmatpush.bf16.msra.mxu0 %v2891
    %3063 = vmatpush.bf16.msra.mxu0 %v2889
    %3064 = vmatpush.bf16.msra.mxu0 %v2887
    %3065 = vmatpush.bf16.msra.mxu0 %v2885
    %3066 = vmatmul.bf16.gmra.mxu0 %v2588
    %v3067 = vpop.f32.mrf.mxu0
    %v3068 = vadd.f32 %v3055, %v3067
    %v3069 = vpop.f32.mrf.mxu0
    %3070 = vdwg.mxu0
    %3071 = vmatpush.bf16.msra.mxu0 %v2915
    %3072 = vmatpush.bf16.msra.mxu0 %v2913
    %3073 = vmatpush.bf16.msra.mxu0 %v2911
    %3074 = vmatpush.bf16.msra.mxu0 %v2909
    %3075 = vmatpush.bf16.msra.mxu0 %v2907
    %3076 = vmatpush.bf16.msra.mxu0 %v2905
    %3077 = vmatpush.bf16.msra.mxu0 %v2903
    %3078 = vmatpush.bf16.msra.mxu0 %v2901
    %3079 = vmatmul.bf16.gmra.mxu0 %v2589
    %v3080 = vpop.f32.mrf.mxu0
    %v3081 = vadd.f32 %v3068, %v3080
    %v3082 = vpop.f32.mrf.mxu0
    %3083 = vdwg.mxu0
    %v3084 = vld [vmem:[%s11] sm:$0x3]
    %v3085 = vld [vmem:[%s12] sm:$0x3]
    %v3086 = vadd.f32 %v3029, %v3081
    %3087 = vadd.xlane.f32.xlu0 %v3086
    %v3088 = vpop.xlane.xlu0 %3087
    %v3089 = vrcp.pop 256.0
    %v3090 = vmul.f32 256.0, %v3089
    %v3091 = vsub.f32 1.0, %v3090
    %v3092 = vmul.f32 %v3089, %v3091
    %v3093 = vadd.f32 %v3089, %v3092
    %vm3094 = vweird.f32 %v3089
    %v3095 = vsel %vm3094, %v3089, %v3093
    %v3096 = vmul.f32 %v3088, %v3095
    %v3097 = vsub.f32 %v3029, %v3096
    %v3098 = vsub.f32 %v3081, %v3096
    %v3099 = vmul.f32 %v3097, %v3097
    %v3100 = vmul.f32 %v3098, %v3098
    %v3101 = vadd.f32 %v3099, %v3100
    %3102 = vadd.xlane.f32.xlu0 %v3101
    %v3103 = vpop.xlane.xlu0 %3102
    %v3104 = vmul.f32 %v3103, %v3095
    %v3105 = vadd.f32 %v3104, 1e-05
    %v3106 = vrsqrt.pop %v3105
    %v3107 = vmul.f32 %v3106, %v3105
    %v3108 = vmul.f32 %v3107, %v3106
    %v3109 = vmul.f32 0.5, %v3108
    %v3110 = vsub.f32 1.5, %v3109
    %v3111 = vmul.f32 %v3106, %v3110
    %vm3112 = vweird.f32 %v3105
    %vm3113 = vweird.f32 %v3106
    %vm3114 = vmor %vm3112, %vm3113
    %v3115 = vsel %vm3114, %v3106, %v3111
    %v3116 = vmul.f32 %v3097, %v3115
    %v3117 = vmul.f32 %v3098, %v3115
    %v3119 = vperm.slane %v3084, 0
    %v3120 = vperm.slane %v3084, 1
    %v3123 = vmul.f32 %v3116, %v3119
    %v3124 = vmul.f32 %v3117, %v3120
    %v3126 = vperm.slane %v3085, 0
    %v3127 = vperm.slane %v3085, 1
    %v3130 = vadd.f32 %v3123, %v3126
    %v3131 = vadd.f32 %v3124, %v3127
    %v3132 = vmax.f32 %v3130, 0.0
    %v3133 = vmax.f32 %v3131, 0.0
    %v3134 = vpack.c.bf16 %v3132, %v3132
    %v3135 = vpack.c.bf16 %v3133, %v3133
    %v3136 = vld [vmem:[#allocation17] sm:$0xf]
    %v3137 = vld [vmem:[#allocation17 + $0x4] sm:$0xf]
    %v3138 = vld [vmem:[#allocation17 + $0x8] sm:$0xf]
    %v3139 = vld [vmem:[#allocation17 + $0xc] sm:$0xf]
    %v3140 = vld [vmem:[#allocation17 + $0x10] sm:$0xf]
    %v3141 = vld [vmem:[#allocation17 + $0x14] sm:$0xf]
    %v3142 = vld [vmem:[#allocation17 + $0x18] sm:$0xf]
    %v3143 = vld [vmem:[#allocation17 + $0x1c] sm:$0xf]
    %v3144 = vld [vmem:[#allocation17 + $0x20] sm:$0xf]
    %v3145 = vld [vmem:[#allocation17 + $0x24] sm:$0xf]
    %v3146 = vld [vmem:[#allocation17 + $0x28] sm:$0xf]
    %v3147 = vld [vmem:[#allocation17 + $0x2c] sm:$0xf]
    %v3148 = vld [vmem:[#allocation17 + $0x30] sm:$0xf]
    %v3149 = vld [vmem:[#allocation17 + $0x34] sm:$0xf]
    %v3150 = vld [vmem:[#allocation17 + $0x38] sm:$0xf]
    %v3151 = vld [vmem:[#allocation17 + $0x3c] sm:$0xf]
    %v3152 = vld [vmem:[#allocation17 + $0x40] sm:$0xf]
    %v3153 = vld [vmem:[#allocation17 + $0x44] sm:$0xf]
    %v3154 = vld [vmem:[#allocation17 + $0x48] sm:$0xf]
    %v3155 = vld [vmem:[#allocation17 + $0x4c] sm:$0xf]
    %v3156 = vld [vmem:[#allocation17 + $0x50] sm:$0xf]
    %v3157 = vld [vmem:[#allocation17 + $0x54] sm:$0xf]
    %v3158 = vld [vmem:[#allocation17 + $0x58] sm:$0xf]
    %v3159 = vld [vmem:[#allocation17 + $0x5c] sm:$0xf]
    %v3160 = vld [vmem:[#allocation17 + $0x60] sm:$0xf]
    %v3161 = vld [vmem:[#allocation17 + $0x64] sm:$0xf]
    %v3162 = vld [vmem:[#allocation17 + $0x68] sm:$0xf]
    %v3163 = vld [vmem:[#allocation17 + $0x6c] sm:$0xf]
    %v3164 = vld [vmem:[#allocation17 + $0x70] sm:$0xf]
    %v3165 = vld [vmem:[#allocation17 + $0x74] sm:$0xf]
    %v3166 = vld [vmem:[#allocation17 + $0x78] sm:$0xf]
    %v3167 = vld [vmem:[#allocation17 + $0x7c] sm:$0xf]
    %v3168 = vld [vmem:[%s14] sm:$0x1]
    %v3170 = vperm.slane %v3168, 0
    %v3204 = vunpack.c.l.b16 %v3136
    %v3205 = vunpack.c.l.b16 %v3137
    %v3206 = vunpack.c.l.b16 %v3138
    %v3207 = vunpack.c.l.b16 %v3139
    %v3208 = vunpack.c.l.b16 %v3140
    %v3209 = vunpack.c.l.b16 %v3141
    %v3210 = vunpack.c.l.b16 %v3142
    %v3211 = vunpack.c.l.b16 %v3143
    %v3212 = vunpack.c.l.b16 %v3144
    %v3213 = vunpack.c.l.b16 %v3145
    %v3214 = vunpack.c.l.b16 %v3146
    %v3215 = vunpack.c.l.b16 %v3147
    %v3216 = vunpack.c.l.b16 %v3148
    %v3217 = vunpack.c.l.b16 %v3149
    %v3218 = vunpack.c.l.b16 %v3150
    %v3219 = vunpack.c.l.b16 %v3151
    %v3220 = vunpack.c.l.b16 %v3152
    %v3221 = vunpack.c.l.b16 %v3153
    %v3222 = vunpack.c.l.b16 %v3154
    %v3223 = vunpack.c.l.b16 %v3155
    %v3224 = vunpack.c.l.b16 %v3156
    %v3225 = vunpack.c.l.b16 %v3157
    %v3226 = vunpack.c.l.b16 %v3158
    %v3227 = vunpack.c.l.b16 %v3159
    %v3228 = vunpack.c.l.b16 %v3160
    %v3229 = vunpack.c.l.b16 %v3161
    %v3230 = vunpack.c.l.b16 %v3162
    %v3231 = vunpack.c.l.b16 %v3163
    %v3232 = vunpack.c.l.b16 %v3164
    %v3233 = vunpack.c.l.b16 %v3165
    %v3234 = vunpack.c.l.b16 %v3166
    %v3235 = vunpack.c.l.b16 %v3167
    %v3236 = vpack.c.b16 %v3205, %v3204
    %v3237 = vpack.c.b16 %v3207, %v3206
    %v3238 = vpack.c.b16 %v3209, %v3208
    %v3239 = vpack.c.b16 %v3211, %v3210
    %v3240 = vpack.c.b16 %v3213, %v3212
    %v3241 = vpack.c.b16 %v3215, %v3214
    %v3242 = vpack.c.b16 %v3217, %v3216
    %v3243 = vpack.c.b16 %v3219, %v3218
    %v3244 = vpack.c.b16 %v3221, %v3220
    %v3245 = vpack.c.b16 %v3223, %v3222
    %v3246 = vpack.c.b16 %v3225, %v3224
    %v3247 = vpack.c.b16 %v3227, %v3226
    %v3248 = vpack.c.b16 %v3229, %v3228
    %v3249 = vpack.c.b16 %v3231, %v3230
    %v3250 = vpack.c.b16 %v3233, %v3232
    %v3251 = vpack.c.b16 %v3235, %v3234
    %3268 = vmatpush.bf16.msra.mxu0 %v3243
    %3269 = vmatpush.bf16.msra.mxu0 %v3242
    %3270 = vmatpush.bf16.msra.mxu0 %v3241
    %3271 = vmatpush.bf16.msra.mxu0 %v3240
    %3272 = vmatpush.bf16.msra.mxu0 %v3239
    %3273 = vmatpush.bf16.msra.mxu0 %v3238
    %3274 = vmatpush.bf16.msra.mxu0 %v3237
    %3275 = vmatpush.bf16.msra.mxu0 %v3236
    %3276 = vmatmul.bf16.gmra.mxu0 %v3134
    %v3277 = vpop.f32.mrf.mxu0
    %v3278 = vadd.f32 %v3170, %v3277
    %v3279 = vpop.f32.mrf.mxu0
    %3280 = vdwg.mxu0
    %3281 = vmatpush.bf16.msra.mxu0 %v3251
    %3282 = vmatpush.bf16.msra.mxu0 %v3250
    %3283 = vmatpush.bf16.msra.mxu0 %v3249
    %3284 = vmatpush.bf16.msra.mxu0 %v3248
    %3285 = vmatpush.bf16.msra.mxu0 %v3247
    %3286 = vmatpush.bf16.msra.mxu0 %v3246
    %3287 = vmatpush.bf16.msra.mxu0 %v3245
    %3288 = vmatpush.bf16.msra.mxu0 %v3244
    %3289 = vmatmul.bf16.gmra.mxu0 %v3135
    %v3290 = vpop.f32.mrf.mxu0
    %v3291 = vadd.f32 %v3278, %v3290
    %v3292 = vpop.f32.mrf.mxu0
    %3293 = vdwg.mxu0
    %3294 = vst [vmem:[#allocation19] sm:$0xff] %v3291
    // Predicated region
    $region102: #{tpu_custom_call.1} parent=1 // pred_check
      _
    $region103: #{tpu_custom_call.1} parent=1 // pred_check_branch
      %3296 = sbr.rel (0) target = $region105
    $region104: #{tpu_custom_call.1} parent=1 // pred_region
      %3298 = vsyncadd [#allocation4], 0
      %s3300 = sshll.u32 [#allocation19], 4
      %s3301 = int_to_ptr.vmem [resolvable:$true] %s3300
      %s3302 = sshll.u32 %s15, 4
      %s3303 = int_to_ptr.hbm [resolvable:$true] %s3302
      %3305 = dma.vmem_to_hbm [thread:$0]  %s3301, 128, %s3303, [#allocation4]
    $region105: #{tpu_custom_call.1} parent=1 // pred_fallthru
      _
    // Predicated region
    $region106: #{tpu_custom_call.1} parent=1 // pred_check
      _
    $region107: #{tpu_custom_call.1} parent=1 // pred_check_branch
      %3307 = sbr.rel (0) target = $region109
    $region108: #{tpu_custom_call.1} parent=1 // pred_region
      %3309 = dma.done [#allocation4], 128
    $region109: #{tpu_custom_call.1} parent=1 // pred_fallthru
      _
    %3310 = vsyncpa [#allocation3], 1
    %3311 = vsyncpa [#allocation6], 1
    %3312 = vsyncpa [#allocation9], 1
    %3313 = vsyncpa [#allocation12], 1
    %3314 = vsyncpa [#allocation15], 1
    %3315 = vsyncpa [#allocation18], 1
    %3316 = vsyncpa [#allocation4], 1

</llo_original>
